<compile_context>
chip_gen: v5e
topology: v5e:2x2
jax: 0.10.0
libtpu: 0.0.40
codegen_flags: <defaults>
</compile_context>

<pallas_src>
import jax
import jax.numpy as jnp
from jax.experimental import pallas as pl
from jax.experimental.pallas import tpu as pltpu

HIDDEN = 128
INPUT = 8
FC1 = 128
NCLASS = 2
LANE = 128          # padded class dimension (lane-dense output)
SUBLANE = 8         # padded batch dimension


def lstm_model_kernel(x_ref, wih_ref, b_ref, whh_ref, w1_ref, b1_ref,
                      w2_ref, b2_ref, out_ref):
    """Whole forward pass in one invocation.

    x_ref:   (T*Bp, I)   time-major, batch-padded inputs (f32)
    wih_ref: (I, 4H)     input->gates weights, gate order (i,f,o,g) (f32)
    b_ref:   (1, 4H)     combined bias b_ih + b_hh, reordered (f32)
    whh_ref: (H, 4H)     hidden->gates weights, reordered (bf16)
    w1_ref:  (H, FC1)    bf16;  b1_ref: (1, FC1) f32
    w2_ref:  (FC1, 128)  zero-padded beyond class 2 (f32)
    b2_ref:  (1, 128)    -1e30 beyond class 2 (f32)
    out_ref: (Bp, 128)   softmax probs (lanes 0..1 valid)
    """
    H = HIDDEN
    Bp = out_ref.shape[0]
    T = x_ref.shape[0] // Bp

    # One-shot input projection for ALL timesteps (off the serial chain).
    gx = jnp.dot(x_ref[...], wih_ref[...],
                 preferred_element_type=jnp.float32) + b_ref[...]   # (T*Bp, 4H)

    whh = whh_ref[...]                       # (H, 4H) bf16, loop-resident

    h = jnp.zeros((Bp, H), jnp.float32)
    c = jnp.zeros((Bp, H), jnp.float32)

    # T is small and static -> fully unrolled; only h @ whh + gate math
    # remains on the recurrent critical path.
    for t in range(T):
        gates = gx[t * Bp:(t + 1) * Bp, :] + jnp.dot(
            h.astype(jnp.bfloat16), whh, preferred_element_type=jnp.float32)
        ifo = jax.nn.sigmoid(gates[:, :3 * H])        # i | f | o contiguous
        g_g = jnp.tanh(gates[:, 3 * H:])              # g last
        i_g = ifo[:, 0 * H:1 * H]
        f_g = ifo[:, 1 * H:2 * H]
        o_g = ifo[:, 2 * H:3 * H]
        c = f_g * c + i_g * g_g
        h = o_g * jnp.tanh(c)

    # Head: Linear(H,128) -> Linear(128,2) padded to 128 lanes -> softmax.
    z1 = jnp.dot(h.astype(jnp.bfloat16), w1_ref[...],
                 preferred_element_type=jnp.float32) + b1_ref[...]
    z2 = jnp.dot(z1, w2_ref[...],
                 preferred_element_type=jnp.float32) + b2_ref[...]
    # Padded class lanes carry a -1e30 bias -> exp underflows to exactly 0,
    # so a full-lane softmax equals the 2-class softmax on lanes 0..1.
    z2 = z2 - jnp.max(z2, axis=1, keepdims=True)
    e = jnp.exp(z2)
    out_ref[...] = e / jnp.sum(e, axis=1, keepdims=True)


def lstm_model_forward(x, params):
    """x: (B, T, I) float32 (PyTorch batch_first convention)."""
    B, T, I = x.shape
    H = HIDDEN
    Bp = max(SUBLANE, ((B + SUBLANE - 1) // SUBLANE) * SUBLANE)

    # time-major, batch padded to a full sublane group, flattened to 2D
    x_tm = jnp.transpose(x, (1, 0, 2))                       # (T, B, I)
    x_tm = jnp.pad(x_tm, ((0, 0), (0, Bp - B), (0, 0)))      # (T, Bp, I)
    x_flat = x_tm.reshape(T * Bp, I).astype(jnp.float32)     # (T*Bp, I)

    # Reorder gate rows (i, f, g, o) -> (i, f, o, g): one sigmoid slab + tanh.
    perm = jnp.concatenate([jnp.arange(0, H), jnp.arange(H, 2 * H),
                            jnp.arange(3 * H, 4 * H), jnp.arange(2 * H, 3 * H)])
    w_ih_t = params["w_ih"][perm].T                              # (I, 4H) f32
    w_hh_t = params["w_hh"][perm].T.astype(jnp.bfloat16)         # (H, 4H) bf16
    b_comb = (params["b_ih"] + params["b_hh"])[perm].reshape(1, 4 * H)

    w1_t = params["w1"].T.astype(jnp.bfloat16)                   # (H, FC1) bf16
    b1 = params["b1"].reshape(1, FC1)

    # Lane-dense head: pad class dim 2 -> 128; padded lanes get -1e30 bias.
    w2_pad = jnp.zeros((FC1, LANE), jnp.float32).at[:, :NCLASS].set(
        params["w2"].T)
    b2_pad = jnp.full((1, LANE), -1e30, jnp.float32).at[0, :NCLASS].set(
        params["b2"])

    # Everything (<1 MiB) fits VMEM; single grid-free invocation, whole
    # arrays resident in VMEM.
    probs_pad = pl.pallas_call(
        lstm_model_kernel,
        out_shape=jax.ShapeDtypeStruct((Bp, LANE), jnp.float32),
    )(x_flat, w_ih_t, b_comb, w_hh_t, w1_t, b1, w2_pad, b2_pad)

    return probs_pad[:B, :NCLASS]


def init_params(key):
    """Deterministic init matching the PyTorch module's parameter shapes."""
    H, I = HIDDEN, INPUT
    ks = jax.random.split(key, 8)
    s_lstm = 1.0 / jnp.sqrt(H)
    s_fc1 = 1.0 / jnp.sqrt(H)
    s_fc2 = 1.0 / jnp.sqrt(FC1)
    u = lambda k, shape, s: jax.random.uniform(k, shape, jnp.float32, -s, s)
    return {
        "w_ih": u(ks[0], (4 * H, I), s_lstm),
        "w_hh": u(ks[1], (4 * H, H), s_lstm),
        "b_ih": u(ks[2], (4 * H,), s_lstm),
        "b_hh": u(ks[3], (4 * H,), s_lstm),
        "w1": u(ks[4], (FC1, H), s_fc1),
        "b1": u(ks[5], (FC1,), s_fc1),
        "w2": u(ks[6], (NCLASS, FC1), s_fc2),
        "b2": u(ks[7], (NCLASS,), s_fc2),
    }


if __name__ == "__main__":
    key = jax.random.PRNGKey(0)
    k_param, k_x = jax.random.split(key)
    params = init_params(k_param)

    B, T, I = 2, 8, INPUT
    x = jax.random.normal(k_x, (B, T, I), jnp.float32)

    out = lstm_model_forward(x, params)
    out = jax.block_until_ready(out)

    assert out.shape == (B, NCLASS)
    # softmax rows must sum to 1
    assert jnp.allclose(jnp.sum(out, axis=1), 1.0, atol=1e-5)
    print("KERNEL_OK")
</pallas_src>

<mosaic_0001>
module attributes {stable_mosaic.version = 11 : i64} {
  func.func @lstm_model_kernel(%arg0: memref<64x8xf32, #tpu.memory_space<vmem>>, %arg1: memref<8x512xf32, #tpu.memory_space<vmem>>, %arg2: memref<1x512xf32, #tpu.memory_space<vmem>>, %arg3: memref<128x512xbf16, #tpu.memory_space<vmem>>, %arg4: memref<128x128xbf16, #tpu.memory_space<vmem>>, %arg5: memref<1x128xf32, #tpu.memory_space<vmem>>, %arg6: memref<128x128xf32, #tpu.memory_space<vmem>>, %arg7: memref<1x128xf32, #tpu.memory_space<vmem>>, %arg8: memref<8x128xf32, #tpu.memory_space<vmem>>) attributes {dimension_semantics = [], scalar_prefetch = 0 : i64, scratch_operands = 0 : i64, tpu.core_type = #tpu.core_type<tc>} {
    %c0 = arith.constant 0 : index
    %c0_0 = arith.constant 0 : index
    %0 = vector.load %arg0[%c0, %c0_0] : memref<64x8xf32, #tpu.memory_space<vmem>>, vector<64x8xf32>
    %c0_1 = arith.constant 0 : index
    %c0_2 = arith.constant 0 : index
    %1 = vector.load %arg1[%c0_1, %c0_2] : memref<8x512xf32, #tpu.memory_space<vmem>>, vector<8x512xf32>
    %cst = arith.constant dense<0.000000e+00> : vector<64x512xf32>
    %2 = tpu.matmul %0, %1, %cst {dimension_numbers = #tpu.dot_dimension_numbers<[1], [0], [0], [1], [0, 0, 1, 1], [], []>} : vector<64x8xf32>, vector<8x512xf32>, vector<64x512xf32> -> vector<64x512xf32>
    %c0_3 = arith.constant 0 : index
    %c0_4 = arith.constant 0 : index
    %3 = vector.load %arg2[%c0_3, %c0_4] : memref<1x512xf32, #tpu.memory_space<vmem>>, vector<1x512xf32>
    %4 = vector.broadcast %3 : vector<1x512xf32> to vector<64x512xf32>
    %5 = arith.addf %2, %4 : vector<64x512xf32>
    %c0_5 = arith.constant 0 : index
    %c0_6 = arith.constant 0 : index
    %6 = vector.load %arg3[%c0_5, %c0_6] : memref<128x512xbf16, #tpu.memory_space<vmem>>, vector<128x512xbf16>
    %cst_7 = arith.constant 0.000000e+00 : f32
    %7 = vector.broadcast %cst_7 : f32 to vector<8x128xf32>
    %cst_8 = arith.constant 0.000000e+00 : f32
    %8 = vector.broadcast %cst_8 : f32 to vector<8x128xf32>
    %9 = vector.extract_strided_slice %5 {offsets = [0, 0], sizes = [8, 512], strides = [1, 1]} : vector<64x512xf32> to vector<8x512xf32>
    %10 = arith.truncf %7 : vector<8x128xf32> to vector<8x128xbf16>
    %cst_9 = arith.constant dense<0.000000e+00> : vector<8x512xf32>
    %11 = tpu.matmul %10, %6, %cst_9 {dimension_numbers = #tpu.dot_dimension_numbers<[1], [0], [0], [1], [0, 0, 1, 1], [], []>} : vector<8x128xbf16>, vector<128x512xbf16>, vector<8x512xf32> -> vector<8x512xf32>
    %12 = arith.addf %9, %11 : vector<8x512xf32>
    %13 = vector.extract_strided_slice %12 {offsets = [0, 0], sizes = [8, 384], strides = [1, 1]} : vector<8x512xf32> to vector<8x384xf32>
    %14 = arith.negf %13 : vector<8x384xf32>
    %15 = math.exp %14 : vector<8x384xf32>
    %cst_10 = arith.constant 1.000000e+00 : f32
    %16 = vector.broadcast %cst_10 : f32 to vector<8x384xf32>
    %17 = arith.addf %16, %15 : vector<8x384xf32>
    %18 = arith.divf %16, %17 : vector<8x384xf32>
    %19 = vector.extract_strided_slice %12 {offsets = [0, 384], sizes = [8, 128], strides = [1, 1]} : vector<8x512xf32> to vector<8x128xf32>
    %20 = math.tanh %19 : vector<8x128xf32>
    %21 = vector.extract_strided_slice %18 {offsets = [0, 0], sizes = [8, 128], strides = [1, 1]} : vector<8x384xf32> to vector<8x128xf32>
    %22 = vector.extract_strided_slice %18 {offsets = [0, 128], sizes = [8, 128], strides = [1, 1]} : vector<8x384xf32> to vector<8x128xf32>
    %23 = vector.extract_strided_slice %18 {offsets = [0, 256], sizes = [8, 128], strides = [1, 1]} : vector<8x384xf32> to vector<8x128xf32>
    %24 = arith.mulf %22, %8 : vector<8x128xf32>
    %25 = arith.mulf %21, %20 : vector<8x128xf32>
    %26 = arith.addf %24, %25 : vector<8x128xf32>
    %27 = math.tanh %26 : vector<8x128xf32>
    %28 = arith.mulf %23, %27 : vector<8x128xf32>
    %29 = vector.extract_strided_slice %5 {offsets = [8, 0], sizes = [8, 512], strides = [1, 1]} : vector<64x512xf32> to vector<8x512xf32>
    %30 = arith.truncf %28 : vector<8x128xf32> to vector<8x128xbf16>
    %cst_11 = arith.constant dense<0.000000e+00> : vector<8x512xf32>
    %31 = tpu.matmul %30, %6, %cst_11 {dimension_numbers = #tpu.dot_dimension_numbers<[1], [0], [0], [1], [0, 0, 1, 1], [], []>} : vector<8x128xbf16>, vector<128x512xbf16>, vector<8x512xf32> -> vector<8x512xf32>
    %32 = arith.addf %29, %31 : vector<8x512xf32>
    %33 = vector.extract_strided_slice %32 {offsets = [0, 0], sizes = [8, 384], strides = [1, 1]} : vector<8x512xf32> to vector<8x384xf32>
    %34 = arith.negf %33 : vector<8x384xf32>
    %35 = math.exp %34 : vector<8x384xf32>
    %cst_12 = arith.constant 1.000000e+00 : f32
    %36 = vector.broadcast %cst_12 : f32 to vector<8x384xf32>
    %37 = arith.addf %36, %35 : vector<8x384xf32>
    %38 = arith.divf %36, %37 : vector<8x384xf32>
    %39 = vector.extract_strided_slice %32 {offsets = [0, 384], sizes = [8, 128], strides = [1, 1]} : vector<8x512xf32> to vector<8x128xf32>
    %40 = math.tanh %39 : vector<8x128xf32>
    %41 = vector.extract_strided_slice %38 {offsets = [0, 0], sizes = [8, 128], strides = [1, 1]} : vector<8x384xf32> to vector<8x128xf32>
    %42 = vector.extract_strided_slice %38 {offsets = [0, 128], sizes = [8, 128], strides = [1, 1]} : vector<8x384xf32> to vector<8x128xf32>
    %43 = vector.extract_strided_slice %38 {offsets = [0, 256], sizes = [8, 128], strides = [1, 1]} : vector<8x384xf32> to vector<8x128xf32>
    %44 = arith.mulf %42, %26 : vector<8x128xf32>
    %45 = arith.mulf %41, %40 : vector<8x128xf32>
    %46 = arith.addf %44, %45 : vector<8x128xf32>
    %47 = math.tanh %46 : vector<8x128xf32>
    %48 = arith.mulf %43, %47 : vector<8x128xf32>
    %49 = vector.extract_strided_slice %5 {offsets = [16, 0], sizes = [8, 512], strides = [1, 1]} : vector<64x512xf32> to vector<8x512xf32>
    %50 = arith.truncf %48 : vector<8x128xf32> to vector<8x128xbf16>
    %cst_13 = arith.constant dense<0.000000e+00> : vector<8x512xf32>
    %51 = tpu.matmul %50, %6, %cst_13 {dimension_numbers = #tpu.dot_dimension_numbers<[1], [0], [0], [1], [0, 0, 1, 1], [], []>} : vector<8x128xbf16>, vector<128x512xbf16>, vector<8x512xf32> -> vector<8x512xf32>
    %52 = arith.addf %49, %51 : vector<8x512xf32>
    %53 = vector.extract_strided_slice %52 {offsets = [0, 0], sizes = [8, 384], strides = [1, 1]} : vector<8x512xf32> to vector<8x384xf32>
    %54 = arith.negf %53 : vector<8x384xf32>
    %55 = math.exp %54 : vector<8x384xf32>
    %cst_14 = arith.constant 1.000000e+00 : f32
    %56 = vector.broadcast %cst_14 : f32 to vector<8x384xf32>
    %57 = arith.addf %56, %55 : vector<8x384xf32>
    %58 = arith.divf %56, %57 : vector<8x384xf32>
    %59 = vector.extract_strided_slice %52 {offsets = [0, 384], sizes = [8, 128], strides = [1, 1]} : vector<8x512xf32> to vector<8x128xf32>
    %60 = math.tanh %59 : vector<8x128xf32>
    %61 = vector.extract_strided_slice %58 {offsets = [0, 0], sizes = [8, 128], strides = [1, 1]} : vector<8x384xf32> to vector<8x128xf32>
    %62 = vector.extract_strided_slice %58 {offsets = [0, 128], sizes = [8, 128], strides = [1, 1]} : vector<8x384xf32> to vector<8x128xf32>
    %63 = vector.extract_strided_slice %58 {offsets = [0, 256], sizes = [8, 128], strides = [1, 1]} : vector<8x384xf32> to vector<8x128xf32>
    %64 = arith.mulf %62, %46 : vector<8x128xf32>
    %65 = arith.mulf %61, %60 : vector<8x128xf32>
    %66 = arith.addf %64, %65 : vector<8x128xf32>
    %67 = math.tanh %66 : vector<8x128xf32>
    %68 = arith.mulf %63, %67 : vector<8x128xf32>
    %69 = vector.extract_strided_slice %5 {offsets = [24, 0], sizes = [8, 512], strides = [1, 1]} : vector<64x512xf32> to vector<8x512xf32>
    %70 = arith.truncf %68 : vector<8x128xf32> to vector<8x128xbf16>
    %cst_15 = arith.constant dense<0.000000e+00> : vector<8x512xf32>
    %71 = tpu.matmul %70, %6, %cst_15 {dimension_numbers = #tpu.dot_dimension_numbers<[1], [0], [0], [1], [0, 0, 1, 1], [], []>} : vector<8x128xbf16>, vector<128x512xbf16>, vector<8x512xf32> -> vector<8x512xf32>
    %72 = arith.addf %69, %71 : vector<8x512xf32>
    %73 = vector.extract_strided_slice %72 {offsets = [0, 0], sizes = [8, 384], strides = [1, 1]} : vector<8x512xf32> to vector<8x384xf32>
    %74 = arith.negf %73 : vector<8x384xf32>
    %75 = math.exp %74 : vector<8x384xf32>
    %cst_16 = arith.constant 1.000000e+00 : f32
    %76 = vector.broadcast %cst_16 : f32 to vector<8x384xf32>
    %77 = arith.addf %76, %75 : vector<8x384xf32>
    %78 = arith.divf %76, %77 : vector<8x384xf32>
    %79 = vector.extract_strided_slice %72 {offsets = [0, 384], sizes = [8, 128], strides = [1, 1]} : vector<8x512xf32> to vector<8x128xf32>
    %80 = math.tanh %79 : vector<8x128xf32>
    %81 = vector.extract_strided_slice %78 {offsets = [0, 0], sizes = [8, 128], strides = [1, 1]} : vector<8x384xf32> to vector<8x128xf32>
    %82 = vector.extract_strided_slice %78 {offsets = [0, 128], sizes = [8, 128], strides = [1, 1]} : vector<8x384xf32> to vector<8x128xf32>
    %83 = vector.extract_strided_slice %78 {offsets = [0, 256], sizes = [8, 128], strides = [1, 1]} : vector<8x384xf32> to vector<8x128xf32>
    %84 = arith.mulf %82, %66 : vector<8x128xf32>
    %85 = arith.mulf %81, %80 : vector<8x128xf32>
    %86 = arith.addf %84, %85 : vector<8x128xf32>
    %87 = math.tanh %86 : vector<8x128xf32>
    %88 = arith.mulf %83, %87 : vector<8x128xf32>
    %89 = vector.extract_strided_slice %5 {offsets = [32, 0], sizes = [8, 512], strides = [1, 1]} : vector<64x512xf32> to vector<8x512xf32>
    %90 = arith.truncf %88 : vector<8x128xf32> to vector<8x128xbf16>
    %cst_17 = arith.constant dense<0.000000e+00> : vector<8x512xf32>
    %91 = tpu.matmul %90, %6, %cst_17 {dimension_numbers = #tpu.dot_dimension_numbers<[1], [0], [0], [1], [0, 0, 1, 1], [], []>} : vector<8x128xbf16>, vector<128x512xbf16>, vector<8x512xf32> -> vector<8x512xf32>
    %92 = arith.addf %89, %91 : vector<8x512xf32>
    %93 = vector.extract_strided_slice %92 {offsets = [0, 0], sizes = [8, 384], strides = [1, 1]} : vector<8x512xf32> to vector<8x384xf32>
    %94 = arith.negf %93 : vector<8x384xf32>
    %95 = math.exp %94 : vector<8x384xf32>
    %cst_18 = arith.constant 1.000000e+00 : f32
    %96 = vector.broadcast %cst_18 : f32 to vector<8x384xf32>
    %97 = arith.addf %96, %95 : vector<8x384xf32>
    %98 = arith.divf %96, %97 : vector<8x384xf32>
    %99 = vector.extract_strided_slice %92 {offsets = [0, 384], sizes = [8, 128], strides = [1, 1]} : vector<8x512xf32> to vector<8x128xf32>
    %100 = math.tanh %99 : vector<8x128xf32>
    %101 = vector.extract_strided_slice %98 {offsets = [0, 0], sizes = [8, 128], strides = [1, 1]} : vector<8x384xf32> to vector<8x128xf32>
    %102 = vector.extract_strided_slice %98 {offsets = [0, 128], sizes = [8, 128], strides = [1, 1]} : vector<8x384xf32> to vector<8x128xf32>
    %103 = vector.extract_strided_slice %98 {offsets = [0, 256], sizes = [8, 128], strides = [1, 1]} : vector<8x384xf32> to vector<8x128xf32>
    %104 = arith.mulf %102, %86 : vector<8x128xf32>
    %105 = arith.mulf %101, %100 : vector<8x128xf32>
    %106 = arith.addf %104, %105 : vector<8x128xf32>
    %107 = math.tanh %106 : vector<8x128xf32>
    %108 = arith.mulf %103, %107 : vector<8x128xf32>
    %109 = vector.extract_strided_slice %5 {offsets = [40, 0], sizes = [8, 512], strides = [1, 1]} : vector<64x512xf32> to vector<8x512xf32>
    %110 = arith.truncf %108 : vector<8x128xf32> to vector<8x128xbf16>
    %cst_19 = arith.constant dense<0.000000e+00> : vector<8x512xf32>
    %111 = tpu.matmul %110, %6, %cst_19 {dimension_numbers = #tpu.dot_dimension_numbers<[1], [0], [0], [1], [0, 0, 1, 1], [], []>} : vector<8x128xbf16>, vector<128x512xbf16>, vector<8x512xf32> -> vector<8x512xf32>
    %112 = arith.addf %109, %111 : vector<8x512xf32>
    %113 = vector.extract_strided_slice %112 {offsets = [0, 0], sizes = [8, 384], strides = [1, 1]} : vector<8x512xf32> to vector<8x384xf32>
    %114 = arith.negf %113 : vector<8x384xf32>
    %115 = math.exp %114 : vector<8x384xf32>
    %cst_20 = arith.constant 1.000000e+00 : f32
    %116 = vector.broadcast %cst_20 : f32 to vector<8x384xf32>
    %117 = arith.addf %116, %115 : vector<8x384xf32>
    %118 = arith.divf %116, %117 : vector<8x384xf32>
    %119 = vector.extract_strided_slice %112 {offsets = [0, 384], sizes = [8, 128], strides = [1, 1]} : vector<8x512xf32> to vector<8x128xf32>
    %120 = math.tanh %119 : vector<8x128xf32>
    %121 = vector.extract_strided_slice %118 {offsets = [0, 0], sizes = [8, 128], strides = [1, 1]} : vector<8x384xf32> to vector<8x128xf32>
    %122 = vector.extract_strided_slice %118 {offsets = [0, 128], sizes = [8, 128], strides = [1, 1]} : vector<8x384xf32> to vector<8x128xf32>
    %123 = vector.extract_strided_slice %118 {offsets = [0, 256], sizes = [8, 128], strides = [1, 1]} : vector<8x384xf32> to vector<8x128xf32>
    %124 = arith.mulf %122, %106 : vector<8x128xf32>
    %125 = arith.mulf %121, %120 : vector<8x128xf32>
    %126 = arith.addf %124, %125 : vector<8x128xf32>
    %127 = math.tanh %126 : vector<8x128xf32>
    %128 = arith.mulf %123, %127 : vector<8x128xf32>
    %129 = vector.extract_strided_slice %5 {offsets = [48, 0], sizes = [8, 512], strides = [1, 1]} : vector<64x512xf32> to vector<8x512xf32>
    %130 = arith.truncf %128 : vector<8x128xf32> to vector<8x128xbf16>
    %cst_21 = arith.constant dense<0.000000e+00> : vector<8x512xf32>
    %131 = tpu.matmul %130, %6, %cst_21 {dimension_numbers = #tpu.dot_dimension_numbers<[1], [0], [0], [1], [0, 0, 1, 1], [], []>} : vector<8x128xbf16>, vector<128x512xbf16>, vector<8x512xf32> -> vector<8x512xf32>
    %132 = arith.addf %129, %131 : vector<8x512xf32>
    %133 = vector.extract_strided_slice %132 {offsets = [0, 0], sizes = [8, 384], strides = [1, 1]} : vector<8x512xf32> to vector<8x384xf32>
    %134 = arith.negf %133 : vector<8x384xf32>
    %135 = math.exp %134 : vector<8x384xf32>
    %cst_22 = arith.constant 1.000000e+00 : f32
    %136 = vector.broadcast %cst_22 : f32 to vector<8x384xf32>
    %137 = arith.addf %136, %135 : vector<8x384xf32>
    %138 = arith.divf %136, %137 : vector<8x384xf32>
    %139 = vector.extract_strided_slice %132 {offsets = [0, 384], sizes = [8, 128], strides = [1, 1]} : vector<8x512xf32> to vector<8x128xf32>
    %140 = math.tanh %139 : vector<8x128xf32>
    %141 = vector.extract_strided_slice %138 {offsets = [0, 0], sizes = [8, 128], strides = [1, 1]} : vector<8x384xf32> to vector<8x128xf32>
    %142 = vector.extract_strided_slice %138 {offsets = [0, 128], sizes = [8, 128], strides = [1, 1]} : vector<8x384xf32> to vector<8x128xf32>
    %143 = vector.extract_strided_slice %138 {offsets = [0, 256], sizes = [8, 128], strides = [1, 1]} : vector<8x384xf32> to vector<8x128xf32>
    %144 = arith.mulf %142, %126 : vector<8x128xf32>
    %145 = arith.mulf %141, %140 : vector<8x128xf32>
    %146 = arith.addf %144, %145 : vector<8x128xf32>
    %147 = math.tanh %146 : vector<8x128xf32>
    %148 = arith.mulf %143, %147 : vector<8x128xf32>
    %149 = vector.extract_strided_slice %5 {offsets = [56, 0], sizes = [8, 512], strides = [1, 1]} : vector<64x512xf32> to vector<8x512xf32>
    %150 = arith.truncf %148 : vector<8x128xf32> to vector<8x128xbf16>
    %cst_23 = arith.constant dense<0.000000e+00> : vector<8x512xf32>
    %151 = tpu.matmul %150, %6, %cst_23 {dimension_numbers = #tpu.dot_dimension_numbers<[1], [0], [0], [1], [0, 0, 1, 1], [], []>} : vector<8x128xbf16>, vector<128x512xbf16>, vector<8x512xf32> -> vector<8x512xf32>
    %152 = arith.addf %149, %151 : vector<8x512xf32>
    %153 = vector.extract_strided_slice %152 {offsets = [0, 0], sizes = [8, 384], strides = [1, 1]} : vector<8x512xf32> to vector<8x384xf32>
    %154 = arith.negf %153 : vector<8x384xf32>
    %155 = math.exp %154 : vector<8x384xf32>
    %cst_24 = arith.constant 1.000000e+00 : f32
    %156 = vector.broadcast %cst_24 : f32 to vector<8x384xf32>
    %157 = arith.addf %156, %155 : vector<8x384xf32>
    %158 = arith.divf %156, %157 : vector<8x384xf32>
    %159 = vector.extract_strided_slice %152 {offsets = [0, 384], sizes = [8, 128], strides = [1, 1]} : vector<8x512xf32> to vector<8x128xf32>
    %160 = math.tanh %159 : vector<8x128xf32>
    %161 = vector.extract_strided_slice %158 {offsets = [0, 0], sizes = [8, 128], strides = [1, 1]} : vector<8x384xf32> to vector<8x128xf32>
    %162 = vector.extract_strided_slice %158 {offsets = [0, 128], sizes = [8, 128], strides = [1, 1]} : vector<8x384xf32> to vector<8x128xf32>
    %163 = vector.extract_strided_slice %158 {offsets = [0, 256], sizes = [8, 128], strides = [1, 1]} : vector<8x384xf32> to vector<8x128xf32>
    %164 = arith.mulf %162, %146 : vector<8x128xf32>
    %165 = arith.mulf %161, %160 : vector<8x128xf32>
    %166 = arith.addf %164, %165 : vector<8x128xf32>
    %167 = math.tanh %166 : vector<8x128xf32>
    %168 = arith.mulf %163, %167 : vector<8x128xf32>
    %169 = arith.truncf %168 : vector<8x128xf32> to vector<8x128xbf16>
    %c0_25 = arith.constant 0 : index
    %c0_26 = arith.constant 0 : index
    %170 = vector.load %arg4[%c0_25, %c0_26] : memref<128x128xbf16, #tpu.memory_space<vmem>>, vector<128x128xbf16>
    %cst_27 = arith.constant dense<0.000000e+00> : vector<8x128xf32>
    %171 = tpu.matmul %169, %170, %cst_27 {dimension_numbers = #tpu.dot_dimension_numbers<[1], [0], [0], [1], [0, 0, 1, 1], [], []>} : vector<8x128xbf16>, vector<128x128xbf16>, vector<8x128xf32> -> vector<8x128xf32>
    %c0_28 = arith.constant 0 : index
    %c0_29 = arith.constant 0 : index
    %172 = vector.load %arg5[%c0_28, %c0_29] : memref<1x128xf32, #tpu.memory_space<vmem>>, vector<1x128xf32>
    %173 = vector.broadcast %172 : vector<1x128xf32> to vector<8x128xf32>
    %174 = arith.addf %171, %173 : vector<8x128xf32>
    %c0_30 = arith.constant 0 : index
    %c0_31 = arith.constant 0 : index
    %175 = vector.load %arg6[%c0_30, %c0_31] : memref<128x128xf32, #tpu.memory_space<vmem>>, vector<128x128xf32>
    %cst_32 = arith.constant dense<0.000000e+00> : vector<8x128xf32>
    %176 = tpu.matmul %174, %175, %cst_32 {dimension_numbers = #tpu.dot_dimension_numbers<[1], [0], [0], [1], [0, 0, 1, 1], [], []>} : vector<8x128xf32>, vector<128x128xf32>, vector<8x128xf32> -> vector<8x128xf32>
    %c0_33 = arith.constant 0 : index
    %c0_34 = arith.constant 0 : index
    %177 = vector.load %arg7[%c0_33, %c0_34] : memref<1x128xf32, #tpu.memory_space<vmem>>, vector<1x128xf32>
    %178 = vector.broadcast %177 : vector<1x128xf32> to vector<8x128xf32>
    %179 = arith.addf %176, %178 : vector<8x128xf32>
    %cst_35 = arith.constant dense<0xFF800000> : vector<8xf32>
    %180 = vector.multi_reduction <maximumf>, %179, %cst_35 [1] : vector<8x128xf32> to vector<8xf32>
    %181 = vector.shape_cast %180 : vector<8xf32> to vector<8x1xf32>
    %182 = vector.broadcast %181 : vector<8x1xf32> to vector<8x128xf32>
    %183 = arith.subf %179, %182 : vector<8x128xf32>
    %184 = math.exp %183 : vector<8x128xf32>
    %cst_36 = arith.constant dense<0.000000e+00> : vector<8xf32>
    %185 = vector.multi_reduction <add>, %184, %cst_36 [1] : vector<8x128xf32> to vector<8xf32>
    %186 = vector.shape_cast %185 : vector<8xf32> to vector<8x1xf32>
    %187 = vector.broadcast %186 : vector<8x1xf32> to vector<8x128xf32>
    %188 = arith.divf %184, %187 : vector<8x128xf32>
    %c0_37 = arith.constant 0 : index
    %c0_38 = arith.constant 0 : index
    %189 = vector.load %arg8[%c0_37, %c0_38] : memref<8x128xf32, #tpu.memory_space<vmem>>, vector<8x128xf32>
    tpu.vector_store %arg8[%c0_37, %c0_38], %188 {strides = array<i32>} : memref<8x128xf32, #tpu.memory_space<vmem>>, vector<8x128xf32>,
    return
  }
}

</mosaic_0001>

<llo_original>
// kernel: tpu_custom_call.1
$region0: #{tpu_custom_call.1}
  #allocation0 [shape = 'u32[]', space=smem, size = 0x4, offset = 0x4, fixed_abs, tag = 'smem constant byte address 0x4 - core index']
  #allocation1 [shape = 'u32[72,128]{1,0:T(1,128)}', space=vmem, size = 0x9000, scoped, tag = 'internal scratch']
  %s0 = inlined_call_operand.vmem [shape: f32[64,8], index: 0, kind: input, shape index: {}]
  %s1 = inlined_call_operand.hbm [shape: f32[8,512], index: 1, kind: input, shape index: {}]
  %s2 = inlined_call_operand.vmem [shape: f32[1,512], index: 2, kind: input, shape index: {}]
  %s3 = inlined_call_operand.hbm [shape: bf16[128,512], index: 3, kind: input, shape index: {}]
  %s4 = inlined_call_operand.vmem [shape: bf16[128,128], index: 4, kind: input, shape index: {}]
  %s5 = inlined_call_operand.vmem [shape: f32[1,128], index: 5, kind: input, shape index: {}]
  %s6 = inlined_call_operand.hbm [shape: f32[128,128], index: 6, kind: input, shape index: {}]
  %s7 = inlined_call_operand.vmem [shape: f32[1,128], index: 7, kind: input, shape index: {}]
  %s8 = inlined_call_operand.hbm [shape: f32[8,128], index: 8, kind: output, shape index: {}]
  %s9 = sld [smem:[#allocation0]]
  $region54: #{tpu_custom_call.1} parent=0
    _
  %s11 = ssub.s32 1, %s9
  %s12 = scalar_select 0, %s11, %s9
  $region1: #{tpu_custom_call.1} parent=0
    #allocation2 [shape = 'u8[16384]{0}', space=vmem, size = 0x4000, scoped, tag = 'input window, operand 1, single buffered']
    #allocation3 [shape = 's32[1]{0}', space=sflag, size = 0x4, scoped, tag = 'scoped memory for tpu_custom_call.1']
    #allocation4 [shape = 's32[1]{0}', space=sflag, size = 0x4, scoped, tag = 'scoped memory for tpu_custom_call.1']
    #allocation5 [shape = 'u8[131072]{0}', space=vmem, size = 0x20000, scoped, tag = 'input window, operand 3, single buffered']
    #allocation6 [shape = 's32[1]{0}', space=sflag, size = 0x4, scoped, tag = 'scoped memory for tpu_custom_call.1']
    #allocation7 [shape = 'u8[65536]{0}', space=vmem, size = 0x10000, scoped, tag = 'input window, operand 6, single buffered']
    #allocation8 [shape = 'u8[4096]{0}', space=vmem, size = 0x1000, scoped, tag = 'output window, operand 0, single buffered']
    %13 = vsyncpa [#allocation3], 0
    %14 = vsyncpa [#allocation6], 0
    %15 = vsyncpa [#allocation4], 0
    // Predicated region
    $region2: #{tpu_custom_call.1} parent=1 // pred_check
      _
    $region3: #{tpu_custom_call.1} parent=1 // pred_check_branch
      %17 = sbr.rel (0) target = $region5
    $region4: #{tpu_custom_call.1} parent=1 // pred_region
      _
    $region5: #{tpu_custom_call.1} parent=1 // pred_fallthru
      _
    // Predicated region
    $region6: #{tpu_custom_call.1} parent=1 // pred_check
      _
    $region7: #{tpu_custom_call.1} parent=1 // pred_check_branch
      %19 = sbr.rel (0) target = $region9
    $region8: #{tpu_custom_call.1} parent=1 // pred_region
      %21 = vsyncadd [#allocation3], 0
      %s23 = sshll.u32 %s1, 4
      %s24 = int_to_ptr.hbm [resolvable:$true] %s23
      %s25 = sshll.u32 [#allocation2], 4
      %s26 = int_to_ptr.vmem [resolvable:$true] %s25
      %28 = dma.hbm_to_vmem [thread:$0]  %s24, 512, %s26, [#allocation3]
    $region9: #{tpu_custom_call.1} parent=1 // pred_fallthru
      _
    // Predicated region
    $region10: #{tpu_custom_call.1} parent=1 // pred_check
      _
    $region11: #{tpu_custom_call.1} parent=1 // pred_check_branch
      %30 = sbr.rel (0) target = $region13
    $region12: #{tpu_custom_call.1} parent=1 // pred_region
      _
    $region13: #{tpu_custom_call.1} parent=1 // pred_fallthru
      _
    // Predicated region
    $region14: #{tpu_custom_call.1} parent=1 // pred_check
      _
    $region15: #{tpu_custom_call.1} parent=1 // pred_check_branch
      %32 = sbr.rel (0) target = $region17
    $region16: #{tpu_custom_call.1} parent=1 // pred_region
      %34 = vsyncadd [#allocation6], 0
      %s35 = sshll.u32 %s3, 4
      %s36 = int_to_ptr.hbm [resolvable:$true] %s35
      %s37 = sshll.u32 [#allocation5], 4
      %s38 = int_to_ptr.vmem [resolvable:$true] %s37
      %43 = dma.hbm_to_vmem [thread:$0]  %s36, 4096, %s38, [#allocation6], 256, 256, 16
    $region17: #{tpu_custom_call.1} parent=1 // pred_fallthru
      _
    // Predicated region
    $region18: #{tpu_custom_call.1} parent=1 // pred_check
      _
    $region19: #{tpu_custom_call.1} parent=1 // pred_check_branch
      %45 = sbr.rel (0) target = $region21
    $region20: #{tpu_custom_call.1} parent=1 // pred_region
      _
    $region21: #{tpu_custom_call.1} parent=1 // pred_fallthru
      _
    // Predicated region
    $region22: #{tpu_custom_call.1} parent=1 // pred_check
      _
    $region23: #{tpu_custom_call.1} parent=1 // pred_check_branch
      %47 = sbr.rel (0) target = $region25
    $region24: #{tpu_custom_call.1} parent=1 // pred_region
      _
    $region25: #{tpu_custom_call.1} parent=1 // pred_fallthru
      _
    // Predicated region
    $region26: #{tpu_custom_call.1} parent=1 // pred_check
      _
    $region27: #{tpu_custom_call.1} parent=1 // pred_check_branch
      %49 = sbr.rel (0) target = $region29
    $region28: #{tpu_custom_call.1} parent=1 // pred_region
      %51 = vsyncadd [#allocation6], 0
      %s52 = sshll.u32 %s6, 4
      %s53 = int_to_ptr.hbm [resolvable:$true] %s52
      %s54 = sshll.u32 [#allocation7], 4
      %s55 = int_to_ptr.vmem [resolvable:$true] %s54
      %60 = dma.hbm_to_vmem [thread:$0]  %s53, 2048, %s55, [#allocation6], 128, 128, 8
    $region29: #{tpu_custom_call.1} parent=1 // pred_fallthru
      _
    // Predicated region
    $region30: #{tpu_custom_call.1} parent=1 // pred_check
      _
    $region31: #{tpu_custom_call.1} parent=1 // pred_check_branch
      %62 = sbr.rel (0) target = $region33
    $region32: #{tpu_custom_call.1} parent=1 // pred_region
      _
    $region33: #{tpu_custom_call.1} parent=1 // pred_fallthru
      _
    // Predicated region
    $region34: #{tpu_custom_call.1} parent=1 // pred_check
      _
    $region35: #{tpu_custom_call.1} parent=1 // pred_check_branch
      %64 = sbr.rel (0) target = $region37
    $region36: #{tpu_custom_call.1} parent=1 // pred_region
      %66 = dma.done [#allocation3], 512
    $region37: #{tpu_custom_call.1} parent=1 // pred_fallthru
      _
    // Predicated region
    $region38: #{tpu_custom_call.1} parent=1 // pred_check
      _
    $region39: #{tpu_custom_call.1} parent=1 // pred_check_branch
      %68 = sbr.rel (0) target = $region41
    $region40: #{tpu_custom_call.1} parent=1 // pred_region
      %70 = dma.done [#allocation6], 4096
    $region41: #{tpu_custom_call.1} parent=1 // pred_fallthru
      _
    // Predicated region
    $region42: #{tpu_custom_call.1} parent=1 // pred_check
      _
    $region43: #{tpu_custom_call.1} parent=1 // pred_check_branch
      %72 = sbr.rel (0) target = $region45
    $region44: #{tpu_custom_call.1} parent=1 // pred_region
      %74 = dma.done [#allocation6], 2048
    $region45: #{tpu_custom_call.1} parent=1 // pred_fallthru
      _
    %v76 = vld [vmem:[%s0] sm:$0xff]
    %v77 = vld [vmem:[%s0 + $0x8] sm:$0xff]
    %v78 = vld [vmem:[%s0 + $0x10] sm:$0xff]
    %v79 = vld [vmem:[%s0 + $0x18] sm:$0xff]
    %v80 = vld [vmem:[%s0 + $0x20] sm:$0xff]
    %v81 = vld [vmem:[%s0 + $0x28] sm:$0xff]
    %v82 = vld [vmem:[%s0 + $0x30] sm:$0xff]
    %v83 = vld [vmem:[%s0 + $0x38] sm:$0xff]
    %v84 = vld [vmem:[#allocation2] sm:$0xff]
    %v85 = vld [vmem:[#allocation2 + $0x8] sm:$0xff]
    %v86 = vld [vmem:[#allocation2 + $0x10] sm:$0xff]
    %v87 = vld [vmem:[#allocation2 + $0x18] sm:$0xff]
    %v88 = vld [vmem:[%s2] sm:$0xf]
    %v90 = vperm.slane %v88, 0
    %v91 = vperm.slane %v88, 1
    %v92 = vperm.slane %v88, 2
    %v93 = vperm.slane %v88, 3
    %vm98 = vcmask 64512
    %v100 = vsel %vm98, %v76, 0
    %v103 = vsel %vm98, %v77, 0
    %v106 = vsel %vm98, %v78, 0
    %v109 = vsel %vm98, %v79, 0
    %v112 = vsel %vm98, %v80, 0
    %v115 = vsel %vm98, %v81, 0
    %v118 = vsel %vm98, %v82, 0
    %v121 = vsel %vm98, %v83, 0
    %123 = vmatpush.msra.mxu0 0.0
    %124 = vmatpush.msra.mxu0 0.0
    %125 = vmatpush.msra.mxu0 0.0
    %126 = vmatpush.msra.mxu0 0.0
    %127 = vmatpush.msra.mxu0 0.0
    %128 = vmatpush.msra.mxu0 0.0
    %129 = vmatpush.msra.mxu0 0.0
    %130 = vmatpush.msra.mxu0 0.0
    %131 = vmatpush.msra.mxu0 0.0
    %132 = vmatpush.msra.mxu0 0.0
    %133 = vmatpush.msra.mxu0 0.0
    %134 = vmatpush.msra.mxu0 0.0
    %135 = vmatpush.msra.mxu0 0.0
    %136 = vmatpush.msra.mxu0 0.0
    %137 = vmatpush.msra.mxu0 0.0
    %138 = vmatpush.msra.mxu0 %v84
    %139 = vmatmul.f32.gmra.mxu0 %v100
    %v140 = vpop.f32.mrf.mxu0
    %v141 = vadd.f32 %v90, %v140
    %142 = vmatmul.f32.gmra.mxu0 %v103
    %v143 = vpop.f32.mrf.mxu0
    %v144 = vadd.f32 %v90, %v143
    %145 = vmatmul.f32.gmra.mxu0 %v106
    %v146 = vpop.f32.mrf.mxu0
    %v147 = vadd.f32 %v90, %v146
    %148 = vmatmul.f32.gmra.mxu0 %v109
    %v149 = vpop.f32.mrf.mxu0
    %v150 = vadd.f32 %v90, %v149
    %151 = vmatmul.f32.gmra.mxu0 %v112
    %v152 = vpop.f32.mrf.mxu0
    %v153 = vadd.f32 %v90, %v152
    %154 = vmatmul.f32.gmra.mxu0 %v115
    %v155 = vpop.f32.mrf.mxu0
    %v156 = vadd.f32 %v90, %v155
    %157 = vmatmul.f32.gmra.mxu0 %v118
    %v158 = vpop.f32.mrf.mxu0
    %v159 = vadd.f32 %v90, %v158
    %160 = vmatmul.f32.gmra.mxu0 %v121
    %v161 = vpop.f32.mrf.mxu0
    %v162 = vadd.f32 %v90, %v161
    %163 = vdwg.mxu0
    %164 = vmatpush.msra.mxu0 0.0
    %165 = vmatpush.msra.mxu0 0.0
    %166 = vmatpush.msra.mxu0 0.0
    %167 = vmatpush.msra.mxu0 0.0
    %168 = vmatpush.msra.mxu0 0.0
    %169 = vmatpush.msra.mxu0 0.0
    %170 = vmatpush.msra.mxu0 0.0
    %171 = vmatpush.msra.mxu0 0.0
    %172 = vmatpush.msra.mxu0 0.0
    %173 = vmatpush.msra.mxu0 0.0
    %174 = vmatpush.msra.mxu0 0.0
    %175 = vmatpush.msra.mxu0 0.0
    %176 = vmatpush.msra.mxu0 0.0
    %177 = vmatpush.msra.mxu0 0.0
    %178 = vmatpush.msra.mxu0 0.0
    %179 = vmatpush.msra.mxu0 %v85
    %180 = vmatmul.f32.gmra.mxu0 %v100
    %v181 = vpop.f32.mrf.mxu0
    %v182 = vadd.f32 %v91, %v181
    %183 = vmatmul.f32.gmra.mxu0 %v103
    %v184 = vpop.f32.mrf.mxu0
    %v185 = vadd.f32 %v91, %v184
    %186 = vmatmul.f32.gmra.mxu0 %v106
    %v187 = vpop.f32.mrf.mxu0
    %v188 = vadd.f32 %v91, %v187
    %189 = vmatmul.f32.gmra.mxu0 %v109
    %v190 = vpop.f32.mrf.mxu0
    %v191 = vadd.f32 %v91, %v190
    %192 = vmatmul.f32.gmra.mxu0 %v112
    %v193 = vpop.f32.mrf.mxu0
    %v194 = vadd.f32 %v91, %v193
    %195 = vmatmul.f32.gmra.mxu0 %v115
    %v196 = vpop.f32.mrf.mxu0
    %v197 = vadd.f32 %v91, %v196
    %198 = vmatmul.f32.gmra.mxu0 %v118
    %v199 = vpop.f32.mrf.mxu0
    %v200 = vadd.f32 %v91, %v199
    %201 = vmatmul.f32.gmra.mxu0 %v121
    %v202 = vpop.f32.mrf.mxu0
    %v203 = vadd.f32 %v91, %v202
    %204 = vdwg.mxu0
    %205 = vmatpush.msra.mxu0 0.0
    %206 = vmatpush.msra.mxu0 0.0
    %207 = vmatpush.msra.mxu0 0.0
    %208 = vmatpush.msra.mxu0 0.0
    %209 = vmatpush.msra.mxu0 0.0
    %210 = vmatpush.msra.mxu0 0.0
    %211 = vmatpush.msra.mxu0 0.0
    %212 = vmatpush.msra.mxu0 0.0
    %213 = vmatpush.msra.mxu0 0.0
    %214 = vmatpush.msra.mxu0 0.0
    %215 = vmatpush.msra.mxu0 0.0
    %216 = vmatpush.msra.mxu0 0.0
    %217 = vmatpush.msra.mxu0 0.0
    %218 = vmatpush.msra.mxu0 0.0
    %219 = vmatpush.msra.mxu0 0.0
    %220 = vmatpush.msra.mxu0 %v86
    %221 = vmatmul.f32.gmra.mxu0 %v100
    %v222 = vpop.f32.mrf.mxu0
    %v223 = vadd.f32 %v92, %v222
    %224 = vmatmul.f32.gmra.mxu0 %v103
    %v225 = vpop.f32.mrf.mxu0
    %v226 = vadd.f32 %v92, %v225
    %227 = vmatmul.f32.gmra.mxu0 %v106
    %v228 = vpop.f32.mrf.mxu0
    %v229 = vadd.f32 %v92, %v228
    %230 = vmatmul.f32.gmra.mxu0 %v109
    %v231 = vpop.f32.mrf.mxu0
    %v232 = vadd.f32 %v92, %v231
    %233 = vmatmul.f32.gmra.mxu0 %v112
    %v234 = vpop.f32.mrf.mxu0
    %v235 = vadd.f32 %v92, %v234
    %236 = vmatmul.f32.gmra.mxu0 %v115
    %v237 = vpop.f32.mrf.mxu0
    %v238 = vadd.f32 %v92, %v237
    %239 = vmatmul.f32.gmra.mxu0 %v118
    %v240 = vpop.f32.mrf.mxu0
    %v241 = vadd.f32 %v92, %v240
    %242 = vmatmul.f32.gmra.mxu0 %v121
    %v243 = vpop.f32.mrf.mxu0
    %v244 = vadd.f32 %v92, %v243
    %245 = vdwg.mxu0
    %246 = vmatpush.msra.mxu0 0.0
    %247 = vmatpush.msra.mxu0 0.0
    %248 = vmatpush.msra.mxu0 0.0
    %249 = vmatpush.msra.mxu0 0.0
    %250 = vmatpush.msra.mxu0 0.0
    %251 = vmatpush.msra.mxu0 0.0
    %252 = vmatpush.msra.mxu0 0.0
    %253 = vmatpush.msra.mxu0 0.0
    %254 = vmatpush.msra.mxu0 0.0
    %255 = vmatpush.msra.mxu0 0.0
    %256 = vmatpush.msra.mxu0 0.0
    %257 = vmatpush.msra.mxu0 0.0
    %258 = vmatpush.msra.mxu0 0.0
    %259 = vmatpush.msra.mxu0 0.0
    %260 = vmatpush.msra.mxu0 0.0
    %261 = vmatpush.msra.mxu0 %v87
    %262 = vmatmul.f32.gmra.mxu0 %v100
    %v263 = vpop.f32.mrf.mxu0
    %v264 = vadd.f32 %v93, %v263
    %265 = vmatmul.f32.gmra.mxu0 %v103
    %v266 = vpop.f32.mrf.mxu0
    %v267 = vadd.f32 %v93, %v266
    %268 = vmatmul.f32.gmra.mxu0 %v106
    %v269 = vpop.f32.mrf.mxu0
    %v270 = vadd.f32 %v93, %v269
    %271 = vmatmul.f32.gmra.mxu0 %v109
    %v272 = vpop.f32.mrf.mxu0
    %v273 = vadd.f32 %v93, %v272
    %274 = vmatmul.f32.gmra.mxu0 %v112
    %v275 = vpop.f32.mrf.mxu0
    %v276 = vadd.f32 %v93, %v275
    %277 = vmatmul.f32.gmra.mxu0 %v115
    %v278 = vpop.f32.mrf.mxu0
    %v279 = vadd.f32 %v93, %v278
    %280 = vmatmul.f32.gmra.mxu0 %v118
    %v281 = vpop.f32.mrf.mxu0
    %v282 = vadd.f32 %v93, %v281
    %283 = vmatmul.f32.gmra.mxu0 %v121
    %v284 = vpop.f32.mrf.mxu0
    %v285 = vadd.f32 %v93, %v284
    %286 = vdwg.mxu0
    %v287 = vld [vmem:[#allocation5] sm:$0xff]
    %v288 = vld [vmem:[#allocation5 + $0x8] sm:$0xff]
    %v289 = vld [vmem:[#allocation5 + $0x10] sm:$0xff]
    %v290 = vld [vmem:[#allocation5 + $0x18] sm:$0xff]
    %v291 = vld [vmem:[#allocation5 + $0x20] sm:$0xff]
    %v292 = vld [vmem:[#allocation5 + $0x28] sm:$0xff]
    %v293 = vld [vmem:[#allocation5 + $0x30] sm:$0xff]
    %v294 = vld [vmem:[#allocation5 + $0x38] sm:$0xff]
    %v295 = vld [vmem:[#allocation5 + $0x40] sm:$0xff]
    %v296 = vld [vmem:[#allocation5 + $0x48] sm:$0xff]
    %v297 = vld [vmem:[#allocation5 + $0x50] sm:$0xff]
    %v298 = vld [vmem:[#allocation5 + $0x58] sm:$0xff]
    %v299 = vld [vmem:[#allocation5 + $0x60] sm:$0xff]
    %v300 = vld [vmem:[#allocation5 + $0x68] sm:$0xff]
    %v301 = vld [vmem:[#allocation5 + $0x70] sm:$0xff]
    %v302 = vld [vmem:[#allocation5 + $0x78] sm:$0xff]
    %v303 = vld [vmem:[#allocation5 + $0x80] sm:$0xff]
    %v304 = vld [vmem:[#allocation5 + $0x88] sm:$0xff]
    %v305 = vld [vmem:[#allocation5 + $0x90] sm:$0xff]
    %v306 = vld [vmem:[#allocation5 + $0x98] sm:$0xff]
    %v307 = vld [vmem:[#allocation5 + $0xa0] sm:$0xff]
    %v308 = vld [vmem:[#allocation5 + $0xa8] sm:$0xff]
    %v309 = vld [vmem:[#allocation5 + $0xb0] sm:$0xff]
    %v310 = vld [vmem:[#allocation5 + $0xb8] sm:$0xff]
    %v311 = vld [vmem:[#allocation5 + $0xc0] sm:$0xff]
    %v312 = vld [vmem:[#allocation5 + $0xc8] sm:$0xff]
    %v313 = vld [vmem:[#allocation5 + $0xd0] sm:$0xff]
    %v314 = vld [vmem:[#allocation5 + $0xd8] sm:$0xff]
    %v315 = vld [vmem:[#allocation5 + $0xe0] sm:$0xff]
    %v316 = vld [vmem:[#allocation5 + $0xe8] sm:$0xff]
    %v317 = vld [vmem:[#allocation5 + $0xf0] sm:$0xff]
    %v318 = vld [vmem:[#allocation5 + $0xf8] sm:$0xff]
    %v351 = vunpack.c.l.b16 %v287
    %v352 = vunpack.c.h.b16 %v287
    %v353 = vunpack.c.l.b16 %v288
    %v354 = vunpack.c.h.b16 %v288
    %v355 = vunpack.c.l.b16 %v289
    %v356 = vunpack.c.h.b16 %v289
    %v357 = vunpack.c.l.b16 %v290
    %v358 = vunpack.c.h.b16 %v290
    %v359 = vunpack.c.l.b16 %v291
    %v360 = vunpack.c.h.b16 %v291
    %v361 = vunpack.c.l.b16 %v292
    %v362 = vunpack.c.h.b16 %v292
    %v363 = vunpack.c.l.b16 %v293
    %v364 = vunpack.c.h.b16 %v293
    %v365 = vunpack.c.l.b16 %v294
    %v366 = vunpack.c.h.b16 %v294
    %v367 = vunpack.c.l.b16 %v295
    %v368 = vunpack.c.h.b16 %v295
    %v369 = vunpack.c.l.b16 %v296
    %v370 = vunpack.c.h.b16 %v296
    %v371 = vunpack.c.l.b16 %v297
    %v372 = vunpack.c.h.b16 %v297
    %v373 = vunpack.c.l.b16 %v298
    %v374 = vunpack.c.h.b16 %v298
    %v375 = vunpack.c.l.b16 %v299
    %v376 = vunpack.c.h.b16 %v299
    %v377 = vunpack.c.l.b16 %v300
    %v378 = vunpack.c.h.b16 %v300
    %v379 = vunpack.c.l.b16 %v301
    %v380 = vunpack.c.h.b16 %v301
    %v381 = vunpack.c.l.b16 %v302
    %v382 = vunpack.c.h.b16 %v302
    %v383 = vunpack.c.l.b16 %v303
    %v384 = vunpack.c.h.b16 %v303
    %v385 = vunpack.c.l.b16 %v304
    %v386 = vunpack.c.h.b16 %v304
    %v387 = vunpack.c.l.b16 %v305
    %v388 = vunpack.c.h.b16 %v305
    %v389 = vunpack.c.l.b16 %v306
    %v390 = vunpack.c.h.b16 %v306
    %v391 = vunpack.c.l.b16 %v307
    %v392 = vunpack.c.h.b16 %v307
    %v393 = vunpack.c.l.b16 %v308
    %v394 = vunpack.c.h.b16 %v308
    %v395 = vunpack.c.l.b16 %v309
    %v396 = vunpack.c.h.b16 %v309
    %v397 = vunpack.c.l.b16 %v310
    %v398 = vunpack.c.h.b16 %v310
    %v399 = vunpack.c.l.b16 %v311
    %v400 = vunpack.c.h.b16 %v311
    %v401 = vunpack.c.l.b16 %v312
    %v402 = vunpack.c.h.b16 %v312
    %v403 = vunpack.c.l.b16 %v313
    %v404 = vunpack.c.h.b16 %v313
    %v405 = vunpack.c.l.b16 %v314
    %v406 = vunpack.c.h.b16 %v314
    %v407 = vunpack.c.l.b16 %v315
    %v408 = vunpack.c.h.b16 %v315
    %v409 = vunpack.c.l.b16 %v316
    %v410 = vunpack.c.h.b16 %v316
    %v411 = vunpack.c.l.b16 %v317
    %v412 = vunpack.c.h.b16 %v317
    %v413 = vunpack.c.l.b16 %v318
    %v414 = vunpack.c.h.b16 %v318
    %v415 = vpack.c.b16 %v355, %v351
    %v416 = vpack.c.b16 %v356, %v352
    %v417 = vpack.c.b16 %v357, %v353
    %v418 = vpack.c.b16 %v358, %v354
    %v419 = vpack.c.b16 %v363, %v359
    %v420 = vpack.c.b16 %v364, %v360
    %v421 = vpack.c.b16 %v365, %v361
    %v422 = vpack.c.b16 %v366, %v362
    %v423 = vpack.c.b16 %v371, %v367
    %v424 = vpack.c.b16 %v372, %v368
    %v425 = vpack.c.b16 %v373, %v369
    %v426 = vpack.c.b16 %v374, %v370
    %v427 = vpack.c.b16 %v379, %v375
    %v428 = vpack.c.b16 %v380, %v376
    %v429 = vpack.c.b16 %v381, %v377
    %v430 = vpack.c.b16 %v382, %v378
    %v431 = vpack.c.b16 %v387, %v383
    %v432 = vpack.c.b16 %v388, %v384
    %v433 = vpack.c.b16 %v389, %v385
    %v434 = vpack.c.b16 %v390, %v386
    %v435 = vpack.c.b16 %v395, %v391
    %v436 = vpack.c.b16 %v396, %v392
    %v437 = vpack.c.b16 %v397, %v393
    %v438 = vpack.c.b16 %v398, %v394
    %v439 = vpack.c.b16 %v403, %v399
    %v440 = vpack.c.b16 %v404, %v400
    %v441 = vpack.c.b16 %v405, %v401
    %v442 = vpack.c.b16 %v406, %v402
    %v443 = vpack.c.b16 %v411, %v407
    %v444 = vpack.c.b16 %v412, %v408
    %v445 = vpack.c.b16 %v413, %v409
    %v446 = vpack.c.b16 %v414, %v410
    %479 = vmatpush.bf16.msra.mxu0 %v443
    %480 = vmatpush.bf16.msra.mxu0 %v439
    %481 = vmatpush.bf16.msra.mxu0 %v435
    %482 = vmatpush.bf16.msra.mxu0 %v431
    %483 = vmatpush.bf16.msra.mxu0 %v427
    %484 = vmatpush.bf16.msra.mxu0 %v423
    %485 = vmatpush.bf16.msra.mxu0 %v419
    %486 = vmatpush.bf16.msra.mxu0 %v415
    %487 = vmatmul.bf16.gmra.mxu0 0
    %v488 = vpop.f32.mrf.mxu0
    %v489 = vadd.f32 0.0, %v488
    %v490 = vpop.f32.mrf.mxu0
    %491 = vdwg.mxu0
    %492 = vmatpush.bf16.msra.mxu0 %v444
    %493 = vmatpush.bf16.msra.mxu0 %v440
    %494 = vmatpush.bf16.msra.mxu0 %v436
    %495 = vmatpush.bf16.msra.mxu0 %v432
    %496 = vmatpush.bf16.msra.mxu0 %v428
    %497 = vmatpush.bf16.msra.mxu0 %v424
    %498 = vmatpush.bf16.msra.mxu0 %v420
    %499 = vmatpush.bf16.msra.mxu0 %v416
    %500 = vmatmul.bf16.gmra.mxu0 0
    %v501 = vpop.f32.mrf.mxu0
    %v502 = vadd.f32 0.0, %v501
    %v503 = vpop.f32.mrf.mxu0
    %504 = vdwg.mxu0
    %505 = vmatpush.bf16.msra.mxu0 %v445
    %506 = vmatpush.bf16.msra.mxu0 %v441
    %507 = vmatpush.bf16.msra.mxu0 %v437
    %508 = vmatpush.bf16.msra.mxu0 %v433
    %509 = vmatpush.bf16.msra.mxu0 %v429
    %510 = vmatpush.bf16.msra.mxu0 %v425
    %511 = vmatpush.bf16.msra.mxu0 %v421
    %512 = vmatpush.bf16.msra.mxu0 %v417
    %513 = vmatmul.bf16.gmra.mxu0 0
    %v514 = vpop.f32.mrf.mxu0
    %v515 = vadd.f32 0.0, %v514
    %v516 = vpop.f32.mrf.mxu0
    %517 = vdwg.mxu0
    %518 = vmatpush.bf16.msra.mxu0 %v446
    %519 = vmatpush.bf16.msra.mxu0 %v442
    %520 = vmatpush.bf16.msra.mxu0 %v438
    %521 = vmatpush.bf16.msra.mxu0 %v434
    %522 = vmatpush.bf16.msra.mxu0 %v430
    %523 = vmatpush.bf16.msra.mxu0 %v426
    %524 = vmatpush.bf16.msra.mxu0 %v422
    %525 = vmatpush.bf16.msra.mxu0 %v418
    %526 = vmatmul.bf16.gmra.mxu0 0
    %v527 = vpop.f32.mrf.mxu0
    %v528 = vadd.f32 0.0, %v527
    %v529 = vpop.f32.mrf.mxu0
    %530 = vdwg.mxu0
    %v531 = vadd.f32 %v141, %v489
    %v532 = vadd.f32 %v182, %v502
    %v533 = vadd.f32 %v223, %v515
    %v534 = vadd.f32 %v264, %v528
    %v535 = vxor.u32 %v531, 2147483648
    %v536 = vxor.u32 %v532, 2147483648
    %v537 = vxor.u32 %v533, 2147483648
    %v538 = vmul.f32 %v535, 1.442695
    %v539 = vpow.pop %v538
    %v540 = vmul.f32 %v536, 1.442695
    %v541 = vpow.pop %v540
    %v542 = vmul.f32 %v537, 1.442695
    %v543 = vpow.pop %v542
    %v544 = vadd.f32 %v539, 1.0
    %v545 = vadd.f32 %v541, 1.0
    %v546 = vadd.f32 %v543, 1.0
    %v547 = vrcp.pop %v544
    %v548 = vmul.f32 %v544, %v547
    %v549 = vsub.f32 1.0, %v548
    %v550 = vmul.f32 %v547, %v549
    %v551 = vadd.f32 %v547, %v550
    %vm552 = vweird.f32 %v544
    %vm553 = vweird.f32 %v547
    %vm554 = vmor %vm552, %vm553
    %v555 = vsel %vm554, %v547, %v551
    %v556 = vand.u32 2147483647, %v544
    %vm557 = vcmp.eq.f32.partialorder %v556, 8.507059e+37
    %v558 = vand.u32 %v544, 2147483648
    %v559 = vor.u32 1.1754944e-38, %v558
    %v560 = vsel %vm557, %v559, %v555
    %v561 = vmul.f32 1.0, %v560
    %v562 = vrcp.pop %v545
    %v563 = vmul.f32 %v545, %v562
    %v564 = vsub.f32 1.0, %v563
    %v565 = vmul.f32 %v562, %v564
    %v566 = vadd.f32 %v562, %v565
    %vm567 = vweird.f32 %v545
    %vm568 = vweird.f32 %v562
    %vm569 = vmor %vm567, %vm568
    %v570 = vsel %vm569, %v562, %v566
    %v571 = vand.u32 2147483647, %v545
    %vm572 = vcmp.eq.f32.partialorder %v571, 8.507059e+37
    %v573 = vand.u32 %v545, 2147483648
    %v574 = vor.u32 1.1754944e-38, %v573
    %v575 = vsel %vm572, %v574, %v570
    %v576 = vmul.f32 1.0, %v575
    %v577 = vrcp.pop %v546
    %v578 = vmul.f32 %v546, %v577
    %v579 = vsub.f32 1.0, %v578
    %v580 = vmul.f32 %v577, %v579
    %v581 = vadd.f32 %v577, %v580
    %vm582 = vweird.f32 %v546
    %vm583 = vweird.f32 %v577
    %vm584 = vmor %vm582, %vm583
    %v585 = vsel %vm584, %v577, %v581
    %v586 = vand.u32 2147483647, %v546
    %vm587 = vcmp.eq.f32.partialorder %v586, 8.507059e+37
    %v588 = vand.u32 %v546, 2147483648
    %v589 = vor.u32 1.1754944e-38, %v588
    %v590 = vsel %vm587, %v589, %v585
    %v591 = vmul.f32 1.0, %v590
    %v592 = vtanh.pop %v534
    %v593 = vmul.f32 %v576, 0.0
    %v594 = vmul.f32 %v561, %v592
    %v595 = vadd.f32 %v593, %v594
    %v596 = vtanh.pop %v595
    %v597 = vmul.f32 %v591, %v596
    %v598 = vpack.c.bf16 %v597, %v597
    %599 = vmatpush.bf16.msra.mxu0 %v443
    %600 = vmatpush.bf16.msra.mxu0 %v439
    %601 = vmatpush.bf16.msra.mxu0 %v435
    %602 = vmatpush.bf16.msra.mxu0 %v431
    %603 = vmatpush.bf16.msra.mxu0 %v427
    %604 = vmatpush.bf16.msra.mxu0 %v423
    %605 = vmatpush.bf16.msra.mxu0 %v419
    %606 = vmatpush.bf16.msra.mxu0 %v415
    %607 = vmatmul.bf16.gmra.mxu0 %v598
    %v608 = vpop.f32.mrf.mxu0
    %v609 = vadd.f32 0.0, %v608
    %v610 = vpop.f32.mrf.mxu0
    %611 = vdwg.mxu0
    %612 = vmatpush.bf16.msra.mxu0 %v444
    %613 = vmatpush.bf16.msra.mxu0 %v440
    %614 = vmatpush.bf16.msra.mxu0 %v436
    %615 = vmatpush.bf16.msra.mxu0 %v432
    %616 = vmatpush.bf16.msra.mxu0 %v428
    %617 = vmatpush.bf16.msra.mxu0 %v424
    %618 = vmatpush.bf16.msra.mxu0 %v420
    %619 = vmatpush.bf16.msra.mxu0 %v416
    %620 = vmatmul.bf16.gmra.mxu0 %v598
    %v621 = vpop.f32.mrf.mxu0
    %v622 = vadd.f32 0.0, %v621
    %v623 = vpop.f32.mrf.mxu0
    %624 = vdwg.mxu0
    %625 = vmatpush.bf16.msra.mxu0 %v445
    %626 = vmatpush.bf16.msra.mxu0 %v441
    %627 = vmatpush.bf16.msra.mxu0 %v437
    %628 = vmatpush.bf16.msra.mxu0 %v433
    %629 = vmatpush.bf16.msra.mxu0 %v429
    %630 = vmatpush.bf16.msra.mxu0 %v425
    %631 = vmatpush.bf16.msra.mxu0 %v421
    %632 = vmatpush.bf16.msra.mxu0 %v417
    %633 = vmatmul.bf16.gmra.mxu0 %v598
    %v634 = vpop.f32.mrf.mxu0
    %v635 = vadd.f32 0.0, %v634
    %v636 = vpop.f32.mrf.mxu0
    %637 = vdwg.mxu0
    %638 = vmatpush.bf16.msra.mxu0 %v446
    %639 = vmatpush.bf16.msra.mxu0 %v442
    %640 = vmatpush.bf16.msra.mxu0 %v438
    %641 = vmatpush.bf16.msra.mxu0 %v434
    %642 = vmatpush.bf16.msra.mxu0 %v430
    %643 = vmatpush.bf16.msra.mxu0 %v426
    %644 = vmatpush.bf16.msra.mxu0 %v422
    %645 = vmatpush.bf16.msra.mxu0 %v418
    %646 = vmatmul.bf16.gmra.mxu0 %v598
    %v647 = vpop.f32.mrf.mxu0
    %v648 = vadd.f32 0.0, %v647
    %v649 = vpop.f32.mrf.mxu0
    %650 = vdwg.mxu0
    %v651 = vadd.f32 %v144, %v609
    %v652 = vadd.f32 %v185, %v622
    %v653 = vadd.f32 %v226, %v635
    %v654 = vadd.f32 %v267, %v648
    %v655 = vxor.u32 %v651, 2147483648
    %v656 = vxor.u32 %v652, 2147483648
    %v657 = vxor.u32 %v653, 2147483648
    %v658 = vmul.f32 %v655, 1.442695
    %v659 = vpow.pop %v658
    %v660 = vmul.f32 %v656, 1.442695
    %v661 = vpow.pop %v660
    %v662 = vmul.f32 %v657, 1.442695
    %v663 = vpow.pop %v662
    %v664 = vadd.f32 %v659, 1.0
    %v665 = vadd.f32 %v661, 1.0
    %v666 = vadd.f32 %v663, 1.0
    %v667 = vrcp.pop %v664
    %v668 = vmul.f32 %v664, %v667
    %v669 = vsub.f32 1.0, %v668
    %v670 = vmul.f32 %v667, %v669
    %v671 = vadd.f32 %v667, %v670
    %vm672 = vweird.f32 %v664
    %vm673 = vweird.f32 %v667
    %vm674 = vmor %vm672, %vm673
    %v675 = vsel %vm674, %v667, %v671
    %v676 = vand.u32 2147483647, %v664
    %vm677 = vcmp.eq.f32.partialorder %v676, 8.507059e+37
    %v678 = vand.u32 %v664, 2147483648
    %v679 = vor.u32 1.1754944e-38, %v678
    %v680 = vsel %vm677, %v679, %v675
    %v681 = vmul.f32 1.0, %v680
    %v682 = vrcp.pop %v665
    %v683 = vmul.f32 %v665, %v682
    %v684 = vsub.f32 1.0, %v683
    %v685 = vmul.f32 %v682, %v684
    %v686 = vadd.f32 %v682, %v685
    %vm687 = vweird.f32 %v665
    %vm688 = vweird.f32 %v682
    %vm689 = vmor %vm687, %vm688
    %v690 = vsel %vm689, %v682, %v686
    %v691 = vand.u32 2147483647, %v665
    %vm692 = vcmp.eq.f32.partialorder %v691, 8.507059e+37
    %v693 = vand.u32 %v665, 2147483648
    %v694 = vor.u32 1.1754944e-38, %v693
    %v695 = vsel %vm692, %v694, %v690
    %v696 = vmul.f32 1.0, %v695
    %v697 = vrcp.pop %v666
    %v698 = vmul.f32 %v666, %v697
    %v699 = vsub.f32 1.0, %v698
    %v700 = vmul.f32 %v697, %v699
    %v701 = vadd.f32 %v697, %v700
    %vm702 = vweird.f32 %v666
    %vm703 = vweird.f32 %v697
    %vm704 = vmor %vm702, %vm703
    %v705 = vsel %vm704, %v697, %v701
    %v706 = vand.u32 2147483647, %v666
    %vm707 = vcmp.eq.f32.partialorder %v706, 8.507059e+37
    %v708 = vand.u32 %v666, 2147483648
    %v709 = vor.u32 1.1754944e-38, %v708
    %v710 = vsel %vm707, %v709, %v705
    %v711 = vmul.f32 1.0, %v710
    %v712 = vtanh.pop %v654
    %v713 = vmul.f32 %v696, %v595
    %v714 = vmul.f32 %v681, %v712
    %v715 = vadd.f32 %v713, %v714
    %v716 = vtanh.pop %v715
    %v717 = vmul.f32 %v711, %v716
    %v718 = vpack.c.bf16 %v717, %v717
    %719 = vmatpush.bf16.msra.mxu0 %v443
    %720 = vmatpush.bf16.msra.mxu0 %v439
    %721 = vmatpush.bf16.msra.mxu0 %v435
    %722 = vmatpush.bf16.msra.mxu0 %v431
    %723 = vmatpush.bf16.msra.mxu0 %v427
    %724 = vmatpush.bf16.msra.mxu0 %v423
    %725 = vmatpush.bf16.msra.mxu0 %v419
    %726 = vmatpush.bf16.msra.mxu0 %v415
    %727 = vmatmul.bf16.gmra.mxu0 %v718
    %v728 = vpop.f32.mrf.mxu0
    %v729 = vadd.f32 0.0, %v728
    %v730 = vpop.f32.mrf.mxu0
    %731 = vdwg.mxu0
    %732 = vmatpush.bf16.msra.mxu0 %v444
    %733 = vmatpush.bf16.msra.mxu0 %v440
    %734 = vmatpush.bf16.msra.mxu0 %v436
    %735 = vmatpush.bf16.msra.mxu0 %v432
    %736 = vmatpush.bf16.msra.mxu0 %v428
    %737 = vmatpush.bf16.msra.mxu0 %v424
    %738 = vmatpush.bf16.msra.mxu0 %v420
    %739 = vmatpush.bf16.msra.mxu0 %v416
    %740 = vmatmul.bf16.gmra.mxu0 %v718
    %v741 = vpop.f32.mrf.mxu0
    %v742 = vadd.f32 0.0, %v741
    %v743 = vpop.f32.mrf.mxu0
    %744 = vdwg.mxu0
    %745 = vmatpush.bf16.msra.mxu0 %v445
    %746 = vmatpush.bf16.msra.mxu0 %v441
    %747 = vmatpush.bf16.msra.mxu0 %v437
    %748 = vmatpush.bf16.msra.mxu0 %v433
    %749 = vmatpush.bf16.msra.mxu0 %v429
    %750 = vmatpush.bf16.msra.mxu0 %v425
    %751 = vmatpush.bf16.msra.mxu0 %v421
    %752 = vmatpush.bf16.msra.mxu0 %v417
    %753 = vmatmul.bf16.gmra.mxu0 %v718
    %v754 = vpop.f32.mrf.mxu0
    %v755 = vadd.f32 0.0, %v754
    %v756 = vpop.f32.mrf.mxu0
    %757 = vdwg.mxu0
    %758 = vmatpush.bf16.msra.mxu0 %v446
    %759 = vmatpush.bf16.msra.mxu0 %v442
    %760 = vmatpush.bf16.msra.mxu0 %v438
    %761 = vmatpush.bf16.msra.mxu0 %v434
    %762 = vmatpush.bf16.msra.mxu0 %v430
    %763 = vmatpush.bf16.msra.mxu0 %v426
    %764 = vmatpush.bf16.msra.mxu0 %v422
    %765 = vmatpush.bf16.msra.mxu0 %v418
    %766 = vmatmul.bf16.gmra.mxu0 %v718
    %v767 = vpop.f32.mrf.mxu0
    %v768 = vadd.f32 0.0, %v767
    %v769 = vpop.f32.mrf.mxu0
    %770 = vdwg.mxu0
    %v771 = vadd.f32 %v147, %v729
    %v772 = vadd.f32 %v188, %v742
    %v773 = vadd.f32 %v229, %v755
    %v774 = vadd.f32 %v270, %v768
    %v775 = vxor.u32 %v771, 2147483648
    %v776 = vxor.u32 %v772, 2147483648
    %v777 = vxor.u32 %v773, 2147483648
    %v778 = vmul.f32 %v775, 1.442695
    %v779 = vpow.pop %v778
    %v780 = vmul.f32 %v776, 1.442695
    %v781 = vpow.pop %v780
    %v782 = vmul.f32 %v777, 1.442695
    %v783 = vpow.pop %v782
    %v784 = vadd.f32 %v779, 1.0
    %v785 = vadd.f32 %v781, 1.0
    %v786 = vadd.f32 %v783, 1.0
    %v787 = vrcp.pop %v784
    %v788 = vmul.f32 %v784, %v787
    %v789 = vsub.f32 1.0, %v788
    %v790 = vmul.f32 %v787, %v789
    %v791 = vadd.f32 %v787, %v790
    %vm792 = vweird.f32 %v784
    %vm793 = vweird.f32 %v787
    %vm794 = vmor %vm792, %vm793
    %v795 = vsel %vm794, %v787, %v791
    %v796 = vand.u32 2147483647, %v784
    %vm797 = vcmp.eq.f32.partialorder %v796, 8.507059e+37
    %v798 = vand.u32 %v784, 2147483648
    %v799 = vor.u32 1.1754944e-38, %v798
    %v800 = vsel %vm797, %v799, %v795
    %v801 = vmul.f32 1.0, %v800
    %v802 = vrcp.pop %v785
    %v803 = vmul.f32 %v785, %v802
    %v804 = vsub.f32 1.0, %v803
    %v805 = vmul.f32 %v802, %v804
    %v806 = vadd.f32 %v802, %v805
    %vm807 = vweird.f32 %v785
    %vm808 = vweird.f32 %v802
    %vm809 = vmor %vm807, %vm808
    %v810 = vsel %vm809, %v802, %v806
    %v811 = vand.u32 2147483647, %v785
    %vm812 = vcmp.eq.f32.partialorder %v811, 8.507059e+37
    %v813 = vand.u32 %v785, 2147483648
    %v814 = vor.u32 1.1754944e-38, %v813
    %v815 = vsel %vm812, %v814, %v810
    %v816 = vmul.f32 1.0, %v815
    %v817 = vrcp.pop %v786
    %v818 = vmul.f32 %v786, %v817
    %v819 = vsub.f32 1.0, %v818
    %v820 = vmul.f32 %v817, %v819
    %v821 = vadd.f32 %v817, %v820
    %vm822 = vweird.f32 %v786
    %vm823 = vweird.f32 %v817
    %vm824 = vmor %vm822, %vm823
    %v825 = vsel %vm824, %v817, %v821
    %v826 = vand.u32 2147483647, %v786
    %vm827 = vcmp.eq.f32.partialorder %v826, 8.507059e+37
    %v828 = vand.u32 %v786, 2147483648
    %v829 = vor.u32 1.1754944e-38, %v828
    %v830 = vsel %vm827, %v829, %v825
    %v831 = vmul.f32 1.0, %v830
    %v832 = vtanh.pop %v774
    %v833 = vmul.f32 %v816, %v715
    %v834 = vmul.f32 %v801, %v832
    %v835 = vadd.f32 %v833, %v834
    %v836 = vtanh.pop %v835
    %v837 = vmul.f32 %v831, %v836
    %v838 = vpack.c.bf16 %v837, %v837
    %839 = vmatpush.bf16.msra.mxu0 %v443
    %840 = vmatpush.bf16.msra.mxu0 %v439
    %841 = vmatpush.bf16.msra.mxu0 %v435
    %842 = vmatpush.bf16.msra.mxu0 %v431
    %843 = vmatpush.bf16.msra.mxu0 %v427
    %844 = vmatpush.bf16.msra.mxu0 %v423
    %845 = vmatpush.bf16.msra.mxu0 %v419
    %846 = vmatpush.bf16.msra.mxu0 %v415
    %847 = vmatmul.bf16.gmra.mxu0 %v838
    %v848 = vpop.f32.mrf.mxu0
    %v849 = vadd.f32 0.0, %v848
    %v850 = vpop.f32.mrf.mxu0
    %851 = vdwg.mxu0
    %852 = vmatpush.bf16.msra.mxu0 %v444
    %853 = vmatpush.bf16.msra.mxu0 %v440
    %854 = vmatpush.bf16.msra.mxu0 %v436
    %855 = vmatpush.bf16.msra.mxu0 %v432
    %856 = vmatpush.bf16.msra.mxu0 %v428
    %857 = vmatpush.bf16.msra.mxu0 %v424
    %858 = vmatpush.bf16.msra.mxu0 %v420
    %859 = vmatpush.bf16.msra.mxu0 %v416
    %860 = vmatmul.bf16.gmra.mxu0 %v838
    %v861 = vpop.f32.mrf.mxu0
    %v862 = vadd.f32 0.0, %v861
    %v863 = vpop.f32.mrf.mxu0
    %864 = vdwg.mxu0
    %865 = vmatpush.bf16.msra.mxu0 %v445
    %866 = vmatpush.bf16.msra.mxu0 %v441
    %867 = vmatpush.bf16.msra.mxu0 %v437
    %868 = vmatpush.bf16.msra.mxu0 %v433
    %869 = vmatpush.bf16.msra.mxu0 %v429
    %870 = vmatpush.bf16.msra.mxu0 %v425
    %871 = vmatpush.bf16.msra.mxu0 %v421
    %872 = vmatpush.bf16.msra.mxu0 %v417
    %873 = vmatmul.bf16.gmra.mxu0 %v838
    %v874 = vpop.f32.mrf.mxu0
    %v875 = vadd.f32 0.0, %v874
    %v876 = vpop.f32.mrf.mxu0
    %877 = vdwg.mxu0
    %878 = vmatpush.bf16.msra.mxu0 %v446
    %879 = vmatpush.bf16.msra.mxu0 %v442
    %880 = vmatpush.bf16.msra.mxu0 %v438
    %881 = vmatpush.bf16.msra.mxu0 %v434
    %882 = vmatpush.bf16.msra.mxu0 %v430
    %883 = vmatpush.bf16.msra.mxu0 %v426
    %884 = vmatpush.bf16.msra.mxu0 %v422
    %885 = vmatpush.bf16.msra.mxu0 %v418
    %886 = vmatmul.bf16.gmra.mxu0 %v838
    %v887 = vpop.f32.mrf.mxu0
    %v888 = vadd.f32 0.0, %v887
    %v889 = vpop.f32.mrf.mxu0
    %890 = vdwg.mxu0
    %v891 = vadd.f32 %v150, %v849
    %v892 = vadd.f32 %v191, %v862
    %v893 = vadd.f32 %v232, %v875
    %v894 = vadd.f32 %v273, %v888
    %v895 = vxor.u32 %v891, 2147483648
    %v896 = vxor.u32 %v892, 2147483648
    %v897 = vxor.u32 %v893, 2147483648
    %v898 = vmul.f32 %v895, 1.442695
    %v899 = vpow.pop %v898
    %v900 = vmul.f32 %v896, 1.442695
    %v901 = vpow.pop %v900
    %v902 = vmul.f32 %v897, 1.442695
    %v903 = vpow.pop %v902
    %v904 = vadd.f32 %v899, 1.0
    %v905 = vadd.f32 %v901, 1.0
    %v906 = vadd.f32 %v903, 1.0
    %v907 = vrcp.pop %v904
    %v908 = vmul.f32 %v904, %v907
    %v909 = vsub.f32 1.0, %v908
    %v910 = vmul.f32 %v907, %v909
    %v911 = vadd.f32 %v907, %v910
    %vm912 = vweird.f32 %v904
    %vm913 = vweird.f32 %v907
    %vm914 = vmor %vm912, %vm913
    %v915 = vsel %vm914, %v907, %v911
    %v916 = vand.u32 2147483647, %v904
    %vm917 = vcmp.eq.f32.partialorder %v916, 8.507059e+37
    %v918 = vand.u32 %v904, 2147483648
    %v919 = vor.u32 1.1754944e-38, %v918
    %v920 = vsel %vm917, %v919, %v915
    %v921 = vmul.f32 1.0, %v920
    %v922 = vrcp.pop %v905
    %v923 = vmul.f32 %v905, %v922
    %v924 = vsub.f32 1.0, %v923
    %v925 = vmul.f32 %v922, %v924
    %v926 = vadd.f32 %v922, %v925
    %vm927 = vweird.f32 %v905
    %vm928 = vweird.f32 %v922
    %vm929 = vmor %vm927, %vm928
    %v930 = vsel %vm929, %v922, %v926
    %v931 = vand.u32 2147483647, %v905
    %vm932 = vcmp.eq.f32.partialorder %v931, 8.507059e+37
    %v933 = vand.u32 %v905, 2147483648
    %v934 = vor.u32 1.1754944e-38, %v933
    %v935 = vsel %vm932, %v934, %v930
    %v936 = vmul.f32 1.0, %v935
    %v937 = vrcp.pop %v906
    %v938 = vmul.f32 %v906, %v937
    %v939 = vsub.f32 1.0, %v938
    %v940 = vmul.f32 %v937, %v939
    %v941 = vadd.f32 %v937, %v940
    %vm942 = vweird.f32 %v906
    %vm943 = vweird.f32 %v937
    %vm944 = vmor %vm942, %vm943
    %v945 = vsel %vm944, %v937, %v941
    %v946 = vand.u32 2147483647, %v906
    %vm947 = vcmp.eq.f32.partialorder %v946, 8.507059e+37
    %v948 = vand.u32 %v906, 2147483648
    %v949 = vor.u32 1.1754944e-38, %v948
    %v950 = vsel %vm947, %v949, %v945
    %v951 = vmul.f32 1.0, %v950
    %v952 = vtanh.pop %v894
    %v953 = vmul.f32 %v936, %v835
    %v954 = vmul.f32 %v921, %v952
    %v955 = vadd.f32 %v953, %v954
    %v956 = vtanh.pop %v955
    %v957 = vmul.f32 %v951, %v956
    %v958 = vpack.c.bf16 %v957, %v957
    %959 = vmatpush.bf16.msra.mxu0 %v443
    %960 = vmatpush.bf16.msra.mxu0 %v439
    %961 = vmatpush.bf16.msra.mxu0 %v435
    %962 = vmatpush.bf16.msra.mxu0 %v431
    %963 = vmatpush.bf16.msra.mxu0 %v427
    %964 = vmatpush.bf16.msra.mxu0 %v423
    %965 = vmatpush.bf16.msra.mxu0 %v419
    %966 = vmatpush.bf16.msra.mxu0 %v415
    %967 = vmatmul.bf16.gmra.mxu0 %v958
    %v968 = vpop.f32.mrf.mxu0
    %v969 = vadd.f32 0.0, %v968
    %v970 = vpop.f32.mrf.mxu0
    %971 = vdwg.mxu0
    %972 = vmatpush.bf16.msra.mxu0 %v444
    %973 = vmatpush.bf16.msra.mxu0 %v440
    %974 = vmatpush.bf16.msra.mxu0 %v436
    %975 = vmatpush.bf16.msra.mxu0 %v432
    %976 = vmatpush.bf16.msra.mxu0 %v428
    %977 = vmatpush.bf16.msra.mxu0 %v424
    %978 = vmatpush.bf16.msra.mxu0 %v420
    %979 = vmatpush.bf16.msra.mxu0 %v416
    %980 = vmatmul.bf16.gmra.mxu0 %v958
    %v981 = vpop.f32.mrf.mxu0
    %v982 = vadd.f32 0.0, %v981
    %v983 = vpop.f32.mrf.mxu0
    %984 = vdwg.mxu0
    %985 = vmatpush.bf16.msra.mxu0 %v445
    %986 = vmatpush.bf16.msra.mxu0 %v441
    %987 = vmatpush.bf16.msra.mxu0 %v437
    %988 = vmatpush.bf16.msra.mxu0 %v433
    %989 = vmatpush.bf16.msra.mxu0 %v429
    %990 = vmatpush.bf16.msra.mxu0 %v425
    %991 = vmatpush.bf16.msra.mxu0 %v421
    %992 = vmatpush.bf16.msra.mxu0 %v417
    %993 = vmatmul.bf16.gmra.mxu0 %v958
    %v994 = vpop.f32.mrf.mxu0
    %v995 = vadd.f32 0.0, %v994
    %v996 = vpop.f32.mrf.mxu0
    %997 = vdwg.mxu0
    %998 = vmatpush.bf16.msra.mxu0 %v446
    %999 = vmatpush.bf16.msra.mxu0 %v442
    %1000 = vmatpush.bf16.msra.mxu0 %v438
    %1001 = vmatpush.bf16.msra.mxu0 %v434
    %1002 = vmatpush.bf16.msra.mxu0 %v430
    %1003 = vmatpush.bf16.msra.mxu0 %v426
    %1004 = vmatpush.bf16.msra.mxu0 %v422
    %1005 = vmatpush.bf16.msra.mxu0 %v418
    %1006 = vmatmul.bf16.gmra.mxu0 %v958
    %v1007 = vpop.f32.mrf.mxu0
    %v1008 = vadd.f32 0.0, %v1007
    %v1009 = vpop.f32.mrf.mxu0
    %1010 = vdwg.mxu0
    %v1011 = vadd.f32 %v153, %v969
    %v1012 = vadd.f32 %v194, %v982
    %v1013 = vadd.f32 %v235, %v995
    %v1014 = vadd.f32 %v276, %v1008
    %v1015 = vxor.u32 %v1011, 2147483648
    %v1016 = vxor.u32 %v1012, 2147483648
    %v1017 = vxor.u32 %v1013, 2147483648
    %v1018 = vmul.f32 %v1015, 1.442695
    %v1019 = vpow.pop %v1018
    %v1020 = vmul.f32 %v1016, 1.442695
    %v1021 = vpow.pop %v1020
    %v1022 = vmul.f32 %v1017, 1.442695
    %v1023 = vpow.pop %v1022
    %v1024 = vadd.f32 %v1019, 1.0
    %v1025 = vadd.f32 %v1021, 1.0
    %v1026 = vadd.f32 %v1023, 1.0
    %v1027 = vrcp.pop %v1024
    %v1028 = vmul.f32 %v1024, %v1027
    %v1029 = vsub.f32 1.0, %v1028
    %v1030 = vmul.f32 %v1027, %v1029
    %v1031 = vadd.f32 %v1027, %v1030
    %vm1032 = vweird.f32 %v1024
    %vm1033 = vweird.f32 %v1027
    %vm1034 = vmor %vm1032, %vm1033
    %v1035 = vsel %vm1034, %v1027, %v1031
    %v1036 = vand.u32 2147483647, %v1024
    %vm1037 = vcmp.eq.f32.partialorder %v1036, 8.507059e+37
    %v1038 = vand.u32 %v1024, 2147483648
    %v1039 = vor.u32 1.1754944e-38, %v1038
    %v1040 = vsel %vm1037, %v1039, %v1035
    %v1041 = vmul.f32 1.0, %v1040
    %v1042 = vrcp.pop %v1025
    %v1043 = vmul.f32 %v1025, %v1042
    %v1044 = vsub.f32 1.0, %v1043
    %v1045 = vmul.f32 %v1042, %v1044
    %v1046 = vadd.f32 %v1042, %v1045
    %vm1047 = vweird.f32 %v1025
    %vm1048 = vweird.f32 %v1042
    %vm1049 = vmor %vm1047, %vm1048
    %v1050 = vsel %vm1049, %v1042, %v1046
    %v1051 = vand.u32 2147483647, %v1025
    %vm1052 = vcmp.eq.f32.partialorder %v1051, 8.507059e+37
    %v1053 = vand.u32 %v1025, 2147483648
    %v1054 = vor.u32 1.1754944e-38, %v1053
    %v1055 = vsel %vm1052, %v1054, %v1050
    %v1056 = vmul.f32 1.0, %v1055
    %v1057 = vrcp.pop %v1026
    %v1058 = vmul.f32 %v1026, %v1057
    %v1059 = vsub.f32 1.0, %v1058
    %v1060 = vmul.f32 %v1057, %v1059
    %v1061 = vadd.f32 %v1057, %v1060
    %vm1062 = vweird.f32 %v1026
    %vm1063 = vweird.f32 %v1057
    %vm1064 = vmor %vm1062, %vm1063
    %v1065 = vsel %vm1064, %v1057, %v1061
    %v1066 = vand.u32 2147483647, %v1026
    %vm1067 = vcmp.eq.f32.partialorder %v1066, 8.507059e+37
    %v1068 = vand.u32 %v1026, 2147483648
    %v1069 = vor.u32 1.1754944e-38, %v1068
    %v1070 = vsel %vm1067, %v1069, %v1065
    %v1071 = vmul.f32 1.0, %v1070
    %v1072 = vtanh.pop %v1014
    %v1073 = vmul.f32 %v1056, %v955
    %v1074 = vmul.f32 %v1041, %v1072
    %v1075 = vadd.f32 %v1073, %v1074
    %v1076 = vtanh.pop %v1075
    %v1077 = vmul.f32 %v1071, %v1076
    %v1078 = vpack.c.bf16 %v1077, %v1077
    %1079 = vmatpush.bf16.msra.mxu0 %v443
    %1080 = vmatpush.bf16.msra.mxu0 %v439
    %1081 = vmatpush.bf16.msra.mxu0 %v435
    %1082 = vmatpush.bf16.msra.mxu0 %v431
    %1083 = vmatpush.bf16.msra.mxu0 %v427
    %1084 = vmatpush.bf16.msra.mxu0 %v423
    %1085 = vmatpush.bf16.msra.mxu0 %v419
    %1086 = vmatpush.bf16.msra.mxu0 %v415
    %1087 = vmatmul.bf16.gmra.mxu0 %v1078
    %v1088 = vpop.f32.mrf.mxu0
    %v1089 = vadd.f32 0.0, %v1088
    %v1090 = vpop.f32.mrf.mxu0
    %1091 = vdwg.mxu0
    %1092 = vmatpush.bf16.msra.mxu0 %v444
    %1093 = vmatpush.bf16.msra.mxu0 %v440
    %1094 = vmatpush.bf16.msra.mxu0 %v436
    %1095 = vmatpush.bf16.msra.mxu0 %v432
    %1096 = vmatpush.bf16.msra.mxu0 %v428
    %1097 = vmatpush.bf16.msra.mxu0 %v424
    %1098 = vmatpush.bf16.msra.mxu0 %v420
    %1099 = vmatpush.bf16.msra.mxu0 %v416
    %1100 = vmatmul.bf16.gmra.mxu0 %v1078
    %v1101 = vpop.f32.mrf.mxu0
    %v1102 = vadd.f32 0.0, %v1101
    %v1103 = vpop.f32.mrf.mxu0
    %1104 = vdwg.mxu0
    %1105 = vmatpush.bf16.msra.mxu0 %v445
    %1106 = vmatpush.bf16.msra.mxu0 %v441
    %1107 = vmatpush.bf16.msra.mxu0 %v437
    %1108 = vmatpush.bf16.msra.mxu0 %v433
    %1109 = vmatpush.bf16.msra.mxu0 %v429
    %1110 = vmatpush.bf16.msra.mxu0 %v425
    %1111 = vmatpush.bf16.msra.mxu0 %v421
    %1112 = vmatpush.bf16.msra.mxu0 %v417
    %1113 = vmatmul.bf16.gmra.mxu0 %v1078
    %v1114 = vpop.f32.mrf.mxu0
    %v1115 = vadd.f32 0.0, %v1114
    %v1116 = vpop.f32.mrf.mxu0
    %1117 = vdwg.mxu0
    %1118 = vmatpush.bf16.msra.mxu0 %v446
    %1119 = vmatpush.bf16.msra.mxu0 %v442
    %1120 = vmatpush.bf16.msra.mxu0 %v438
    %1121 = vmatpush.bf16.msra.mxu0 %v434
    %1122 = vmatpush.bf16.msra.mxu0 %v430
    %1123 = vmatpush.bf16.msra.mxu0 %v426
    %1124 = vmatpush.bf16.msra.mxu0 %v422
    %1125 = vmatpush.bf16.msra.mxu0 %v418
    %1126 = vmatmul.bf16.gmra.mxu0 %v1078
    %v1127 = vpop.f32.mrf.mxu0
    %v1128 = vadd.f32 0.0, %v1127
    %v1129 = vpop.f32.mrf.mxu0
    %1130 = vdwg.mxu0
    %v1131 = vadd.f32 %v156, %v1089
    %v1132 = vadd.f32 %v197, %v1102
    %v1133 = vadd.f32 %v238, %v1115
    %v1134 = vadd.f32 %v279, %v1128
    %v1135 = vxor.u32 %v1131, 2147483648
    %v1136 = vxor.u32 %v1132, 2147483648
    %v1137 = vxor.u32 %v1133, 2147483648
    %v1138 = vmul.f32 %v1135, 1.442695
    %v1139 = vpow.pop %v1138
    %v1140 = vmul.f32 %v1136, 1.442695
    %v1141 = vpow.pop %v1140
    %v1142 = vmul.f32 %v1137, 1.442695
    %v1143 = vpow.pop %v1142
    %v1144 = vadd.f32 %v1139, 1.0
    %v1145 = vadd.f32 %v1141, 1.0
    %v1146 = vadd.f32 %v1143, 1.0
    %v1147 = vrcp.pop %v1144
    %v1148 = vmul.f32 %v1144, %v1147
    %v1149 = vsub.f32 1.0, %v1148
    %v1150 = vmul.f32 %v1147, %v1149
    %v1151 = vadd.f32 %v1147, %v1150
    %vm1152 = vweird.f32 %v1144
    %vm1153 = vweird.f32 %v1147
    %vm1154 = vmor %vm1152, %vm1153
    %v1155 = vsel %vm1154, %v1147, %v1151
    %v1156 = vand.u32 2147483647, %v1144
    %vm1157 = vcmp.eq.f32.partialorder %v1156, 8.507059e+37
    %v1158 = vand.u32 %v1144, 2147483648
    %v1159 = vor.u32 1.1754944e-38, %v1158
    %v1160 = vsel %vm1157, %v1159, %v1155
    %v1161 = vmul.f32 1.0, %v1160
    %v1162 = vrcp.pop %v1145
    %v1163 = vmul.f32 %v1145, %v1162
    %v1164 = vsub.f32 1.0, %v1163
    %v1165 = vmul.f32 %v1162, %v1164
    %v1166 = vadd.f32 %v1162, %v1165
    %vm1167 = vweird.f32 %v1145
    %vm1168 = vweird.f32 %v1162
    %vm1169 = vmor %vm1167, %vm1168
    %v1170 = vsel %vm1169, %v1162, %v1166
    %v1171 = vand.u32 2147483647, %v1145
    %vm1172 = vcmp.eq.f32.partialorder %v1171, 8.507059e+37
    %v1173 = vand.u32 %v1145, 2147483648
    %v1174 = vor.u32 1.1754944e-38, %v1173
    %v1175 = vsel %vm1172, %v1174, %v1170
    %v1176 = vmul.f32 1.0, %v1175
    %v1177 = vrcp.pop %v1146
    %v1178 = vmul.f32 %v1146, %v1177
    %v1179 = vsub.f32 1.0, %v1178
    %v1180 = vmul.f32 %v1177, %v1179
    %v1181 = vadd.f32 %v1177, %v1180
    %vm1182 = vweird.f32 %v1146
    %vm1183 = vweird.f32 %v1177
    %vm1184 = vmor %vm1182, %vm1183
    %v1185 = vsel %vm1184, %v1177, %v1181
    %v1186 = vand.u32 2147483647, %v1146
    %vm1187 = vcmp.eq.f32.partialorder %v1186, 8.507059e+37
    %v1188 = vand.u32 %v1146, 2147483648
    %v1189 = vor.u32 1.1754944e-38, %v1188
    %v1190 = vsel %vm1187, %v1189, %v1185
    %v1191 = vmul.f32 1.0, %v1190
    %v1192 = vtanh.pop %v1134
    %v1193 = vmul.f32 %v1176, %v1075
    %v1194 = vmul.f32 %v1161, %v1192
    %v1195 = vadd.f32 %v1193, %v1194
    %v1196 = vtanh.pop %v1195
    %v1197 = vmul.f32 %v1191, %v1196
    %v1198 = vpack.c.bf16 %v1197, %v1197
    %1199 = vmatpush.bf16.msra.mxu0 %v443
    %1200 = vmatpush.bf16.msra.mxu0 %v439
    %1201 = vmatpush.bf16.msra.mxu0 %v435
    %1202 = vmatpush.bf16.msra.mxu0 %v431
    %1203 = vmatpush.bf16.msra.mxu0 %v427
    %1204 = vmatpush.bf16.msra.mxu0 %v423
    %1205 = vmatpush.bf16.msra.mxu0 %v419
    %1206 = vmatpush.bf16.msra.mxu0 %v415
    %1207 = vmatmul.bf16.gmra.mxu0 %v1198
    %v1208 = vpop.f32.mrf.mxu0
    %v1209 = vadd.f32 0.0, %v1208
    %v1210 = vpop.f32.mrf.mxu0
    %1211 = vdwg.mxu0
    %1212 = vmatpush.bf16.msra.mxu0 %v444
    %1213 = vmatpush.bf16.msra.mxu0 %v440
    %1214 = vmatpush.bf16.msra.mxu0 %v436
    %1215 = vmatpush.bf16.msra.mxu0 %v432
    %1216 = vmatpush.bf16.msra.mxu0 %v428
    %1217 = vmatpush.bf16.msra.mxu0 %v424
    %1218 = vmatpush.bf16.msra.mxu0 %v420
    %1219 = vmatpush.bf16.msra.mxu0 %v416
    %1220 = vmatmul.bf16.gmra.mxu0 %v1198
    %v1221 = vpop.f32.mrf.mxu0
    %v1222 = vadd.f32 0.0, %v1221
    %v1223 = vpop.f32.mrf.mxu0
    %1224 = vdwg.mxu0
    %1225 = vmatpush.bf16.msra.mxu0 %v445
    %1226 = vmatpush.bf16.msra.mxu0 %v441
    %1227 = vmatpush.bf16.msra.mxu0 %v437
    %1228 = vmatpush.bf16.msra.mxu0 %v433
    %1229 = vmatpush.bf16.msra.mxu0 %v429
    %1230 = vmatpush.bf16.msra.mxu0 %v425
    %1231 = vmatpush.bf16.msra.mxu0 %v421
    %1232 = vmatpush.bf16.msra.mxu0 %v417
    %1233 = vmatmul.bf16.gmra.mxu0 %v1198
    %v1234 = vpop.f32.mrf.mxu0
    %v1235 = vadd.f32 0.0, %v1234
    %v1236 = vpop.f32.mrf.mxu0
    %1237 = vdwg.mxu0
    %1238 = vmatpush.bf16.msra.mxu0 %v446
    %1239 = vmatpush.bf16.msra.mxu0 %v442
    %1240 = vmatpush.bf16.msra.mxu0 %v438
    %1241 = vmatpush.bf16.msra.mxu0 %v434
    %1242 = vmatpush.bf16.msra.mxu0 %v430
    %1243 = vmatpush.bf16.msra.mxu0 %v426
    %1244 = vmatpush.bf16.msra.mxu0 %v422
    %1245 = vmatpush.bf16.msra.mxu0 %v418
    %1246 = vmatmul.bf16.gmra.mxu0 %v1198
    %v1247 = vpop.f32.mrf.mxu0
    %v1248 = vadd.f32 0.0, %v1247
    %v1249 = vpop.f32.mrf.mxu0
    %1250 = vdwg.mxu0
    %v1251 = vadd.f32 %v159, %v1209
    %v1252 = vadd.f32 %v200, %v1222
    %v1253 = vadd.f32 %v241, %v1235
    %v1254 = vadd.f32 %v282, %v1248
    %v1255 = vxor.u32 %v1251, 2147483648
    %v1256 = vxor.u32 %v1252, 2147483648
    %v1257 = vxor.u32 %v1253, 2147483648
    %v1258 = vmul.f32 %v1255, 1.442695
    %v1259 = vpow.pop %v1258
    %v1260 = vmul.f32 %v1256, 1.442695
    %v1261 = vpow.pop %v1260
    %v1262 = vmul.f32 %v1257, 1.442695
    %v1263 = vpow.pop %v1262
    %v1264 = vadd.f32 %v1259, 1.0
    %v1265 = vadd.f32 %v1261, 1.0
    %v1266 = vadd.f32 %v1263, 1.0
    %v1267 = vrcp.pop %v1264
    %v1268 = vmul.f32 %v1264, %v1267
    %v1269 = vsub.f32 1.0, %v1268
    %v1270 = vmul.f32 %v1267, %v1269
    %v1271 = vadd.f32 %v1267, %v1270
    %vm1272 = vweird.f32 %v1264
    %vm1273 = vweird.f32 %v1267
    %vm1274 = vmor %vm1272, %vm1273
    %v1275 = vsel %vm1274, %v1267, %v1271
    %v1276 = vand.u32 2147483647, %v1264
    %vm1277 = vcmp.eq.f32.partialorder %v1276, 8.507059e+37
    %v1278 = vand.u32 %v1264, 2147483648
    %v1279 = vor.u32 1.1754944e-38, %v1278
    %v1280 = vsel %vm1277, %v1279, %v1275
    %v1281 = vmul.f32 1.0, %v1280
    %v1282 = vrcp.pop %v1265
    %v1283 = vmul.f32 %v1265, %v1282
    %v1284 = vsub.f32 1.0, %v1283
    %v1285 = vmul.f32 %v1282, %v1284
    %v1286 = vadd.f32 %v1282, %v1285
    %vm1287 = vweird.f32 %v1265
    %vm1288 = vweird.f32 %v1282
    %vm1289 = vmor %vm1287, %vm1288
    %v1290 = vsel %vm1289, %v1282, %v1286
    %v1291 = vand.u32 2147483647, %v1265
    %vm1292 = vcmp.eq.f32.partialorder %v1291, 8.507059e+37
    %v1293 = vand.u32 %v1265, 2147483648
    %v1294 = vor.u32 1.1754944e-38, %v1293
    %v1295 = vsel %vm1292, %v1294, %v1290
    %v1296 = vmul.f32 1.0, %v1295
    %v1297 = vrcp.pop %v1266
    %v1298 = vmul.f32 %v1266, %v1297
    %v1299 = vsub.f32 1.0, %v1298
    %v1300 = vmul.f32 %v1297, %v1299
    %v1301 = vadd.f32 %v1297, %v1300
    %vm1302 = vweird.f32 %v1266
    %vm1303 = vweird.f32 %v1297
    %vm1304 = vmor %vm1302, %vm1303
    %v1305 = vsel %vm1304, %v1297, %v1301
    %v1306 = vand.u32 2147483647, %v1266
    %vm1307 = vcmp.eq.f32.partialorder %v1306, 8.507059e+37
    %v1308 = vand.u32 %v1266, 2147483648
    %v1309 = vor.u32 1.1754944e-38, %v1308
    %v1310 = vsel %vm1307, %v1309, %v1305
    %v1311 = vmul.f32 1.0, %v1310
    %v1312 = vtanh.pop %v1254
    %v1313 = vmul.f32 %v1296, %v1195
    %v1314 = vmul.f32 %v1281, %v1312
    %v1315 = vadd.f32 %v1313, %v1314
    %v1316 = vtanh.pop %v1315
    %v1317 = vmul.f32 %v1311, %v1316
    %v1318 = vpack.c.bf16 %v1317, %v1317
    %1319 = vmatpush.bf16.msra.mxu0 %v443
    %1320 = vmatpush.bf16.msra.mxu0 %v439
    %1321 = vmatpush.bf16.msra.mxu0 %v435
    %1322 = vmatpush.bf16.msra.mxu0 %v431
    %1323 = vmatpush.bf16.msra.mxu0 %v427
    %1324 = vmatpush.bf16.msra.mxu0 %v423
    %1325 = vmatpush.bf16.msra.mxu0 %v419
    %1326 = vmatpush.bf16.msra.mxu0 %v415
    %1327 = vmatmul.bf16.gmra.mxu0 %v1318
    %v1328 = vpop.f32.mrf.mxu0
    %v1329 = vadd.f32 0.0, %v1328
    %v1330 = vpop.f32.mrf.mxu0
    %1331 = vdwg.mxu0
    %1332 = vmatpush.bf16.msra.mxu0 %v444
    %1333 = vmatpush.bf16.msra.mxu0 %v440
    %1334 = vmatpush.bf16.msra.mxu0 %v436
    %1335 = vmatpush.bf16.msra.mxu0 %v432
    %1336 = vmatpush.bf16.msra.mxu0 %v428
    %1337 = vmatpush.bf16.msra.mxu0 %v424
    %1338 = vmatpush.bf16.msra.mxu0 %v420
    %1339 = vmatpush.bf16.msra.mxu0 %v416
    %1340 = vmatmul.bf16.gmra.mxu0 %v1318
    %v1341 = vpop.f32.mrf.mxu0
    %v1342 = vadd.f32 0.0, %v1341
    %v1343 = vpop.f32.mrf.mxu0
    %1344 = vdwg.mxu0
    %1345 = vmatpush.bf16.msra.mxu0 %v445
    %1346 = vmatpush.bf16.msra.mxu0 %v441
    %1347 = vmatpush.bf16.msra.mxu0 %v437
    %1348 = vmatpush.bf16.msra.mxu0 %v433
    %1349 = vmatpush.bf16.msra.mxu0 %v429
    %1350 = vmatpush.bf16.msra.mxu0 %v425
    %1351 = vmatpush.bf16.msra.mxu0 %v421
    %1352 = vmatpush.bf16.msra.mxu0 %v417
    %1353 = vmatmul.bf16.gmra.mxu0 %v1318
    %v1354 = vpop.f32.mrf.mxu0
    %v1355 = vadd.f32 0.0, %v1354
    %v1356 = vpop.f32.mrf.mxu0
    %1357 = vdwg.mxu0
    %1358 = vmatpush.bf16.msra.mxu0 %v446
    %1359 = vmatpush.bf16.msra.mxu0 %v442
    %1360 = vmatpush.bf16.msra.mxu0 %v438
    %1361 = vmatpush.bf16.msra.mxu0 %v434
    %1362 = vmatpush.bf16.msra.mxu0 %v430
    %1363 = vmatpush.bf16.msra.mxu0 %v426
    %1364 = vmatpush.bf16.msra.mxu0 %v422
    %1365 = vmatpush.bf16.msra.mxu0 %v418
    %1366 = vmatmul.bf16.gmra.mxu0 %v1318
    %v1367 = vpop.f32.mrf.mxu0
    %v1368 = vadd.f32 0.0, %v1367
    %v1369 = vpop.f32.mrf.mxu0
    %1370 = vdwg.mxu0
    %v1371 = vadd.f32 %v162, %v1329
    %v1372 = vadd.f32 %v203, %v1342
    %v1373 = vadd.f32 %v244, %v1355
    %v1374 = vadd.f32 %v285, %v1368
    %v1375 = vxor.u32 %v1371, 2147483648
    %v1376 = vxor.u32 %v1372, 2147483648
    %v1377 = vxor.u32 %v1373, 2147483648
    %v1378 = vmul.f32 %v1375, 1.442695
    %v1379 = vpow.pop %v1378
    %v1380 = vmul.f32 %v1376, 1.442695
    %v1381 = vpow.pop %v1380
    %v1382 = vmul.f32 %v1377, 1.442695
    %v1383 = vpow.pop %v1382
    %v1384 = vadd.f32 %v1379, 1.0
    %v1385 = vadd.f32 %v1381, 1.0
    %v1386 = vadd.f32 %v1383, 1.0
    %v1387 = vrcp.pop %v1384
    %v1388 = vmul.f32 %v1384, %v1387
    %v1389 = vsub.f32 1.0, %v1388
    %v1390 = vmul.f32 %v1387, %v1389
    %v1391 = vadd.f32 %v1387, %v1390
    %vm1392 = vweird.f32 %v1384
    %vm1393 = vweird.f32 %v1387
    %vm1394 = vmor %vm1392, %vm1393
    %v1395 = vsel %vm1394, %v1387, %v1391
    %v1396 = vand.u32 2147483647, %v1384
    %vm1397 = vcmp.eq.f32.partialorder %v1396, 8.507059e+37
    %v1398 = vand.u32 %v1384, 2147483648
    %v1399 = vor.u32 1.1754944e-38, %v1398
    %v1400 = vsel %vm1397, %v1399, %v1395
    %v1401 = vmul.f32 1.0, %v1400
    %v1402 = vrcp.pop %v1385
    %v1403 = vmul.f32 %v1385, %v1402
    %v1404 = vsub.f32 1.0, %v1403
    %v1405 = vmul.f32 %v1402, %v1404
    %v1406 = vadd.f32 %v1402, %v1405
    %vm1407 = vweird.f32 %v1385
    %vm1408 = vweird.f32 %v1402
    %vm1409 = vmor %vm1407, %vm1408
    %v1410 = vsel %vm1409, %v1402, %v1406
    %v1411 = vand.u32 2147483647, %v1385
    %vm1412 = vcmp.eq.f32.partialorder %v1411, 8.507059e+37
    %v1413 = vand.u32 %v1385, 2147483648
    %v1414 = vor.u32 1.1754944e-38, %v1413
    %v1415 = vsel %vm1412, %v1414, %v1410
    %v1416 = vmul.f32 1.0, %v1415
    %v1417 = vrcp.pop %v1386
    %v1418 = vmul.f32 %v1386, %v1417
    %v1419 = vsub.f32 1.0, %v1418
    %v1420 = vmul.f32 %v1417, %v1419
    %v1421 = vadd.f32 %v1417, %v1420
    %vm1422 = vweird.f32 %v1386
    %vm1423 = vweird.f32 %v1417
    %vm1424 = vmor %vm1422, %vm1423
    %v1425 = vsel %vm1424, %v1417, %v1421
    %v1426 = vand.u32 2147483647, %v1386
    %vm1427 = vcmp.eq.f32.partialorder %v1426, 8.507059e+37
    %v1428 = vand.u32 %v1386, 2147483648
    %v1429 = vor.u32 1.1754944e-38, %v1428
    %v1430 = vsel %vm1427, %v1429, %v1425
    %v1431 = vmul.f32 1.0, %v1430
    %v1432 = vtanh.pop %v1374
    %v1433 = vmul.f32 %v1416, %v1315
    %v1434 = vmul.f32 %v1401, %v1432
    %v1435 = vadd.f32 %v1433, %v1434
    %v1436 = vtanh.pop %v1435
    %v1437 = vmul.f32 %v1431, %v1436
    %v1438 = vpack.c.bf16 %v1437, %v1437
    %v1439 = vld [vmem:[%s4] sm:$0xf]
    %v1440 = vld [vmem:[%s4 + $0x4] sm:$0xf]
    %v1441 = vld [vmem:[%s4 + $0x8] sm:$0xf]
    %v1442 = vld [vmem:[%s4 + $0xc] sm:$0xf]
    %v1443 = vld [vmem:[%s4 + $0x10] sm:$0xf]
    %v1444 = vld [vmem:[%s4 + $0x14] sm:$0xf]
    %v1445 = vld [vmem:[%s4 + $0x18] sm:$0xf]
    %v1446 = vld [vmem:[%s4 + $0x1c] sm:$0xf]
    %v1447 = vld [vmem:[%s4 + $0x20] sm:$0xf]
    %v1448 = vld [vmem:[%s4 + $0x24] sm:$0xf]
    %v1449 = vld [vmem:[%s4 + $0x28] sm:$0xf]
    %v1450 = vld [vmem:[%s4 + $0x2c] sm:$0xf]
    %v1451 = vld [vmem:[%s4 + $0x30] sm:$0xf]
    %v1452 = vld [vmem:[%s4 + $0x34] sm:$0xf]
    %v1453 = vld [vmem:[%s4 + $0x38] sm:$0xf]
    %v1454 = vld [vmem:[%s4 + $0x3c] sm:$0xf]
    %v1455 = vld [vmem:[%s5] sm:$0x1]
    %v1457 = vperm.slane %v1455, 0
    %v1475 = vunpack.c.l.b16 %v1439
    %v1476 = vunpack.c.l.b16 %v1440
    %v1477 = vunpack.c.l.b16 %v1441
    %v1478 = vunpack.c.l.b16 %v1442
    %v1479 = vunpack.c.l.b16 %v1443
    %v1480 = vunpack.c.l.b16 %v1444
    %v1481 = vunpack.c.l.b16 %v1445
    %v1482 = vunpack.c.l.b16 %v1446
    %v1483 = vunpack.c.l.b16 %v1447
    %v1484 = vunpack.c.l.b16 %v1448
    %v1485 = vunpack.c.l.b16 %v1449
    %v1486 = vunpack.c.l.b16 %v1450
    %v1487 = vunpack.c.l.b16 %v1451
    %v1488 = vunpack.c.l.b16 %v1452
    %v1489 = vunpack.c.l.b16 %v1453
    %v1490 = vunpack.c.l.b16 %v1454
    %v1491 = vpack.c.b16 %v1476, %v1475
    %v1492 = vpack.c.b16 %v1478, %v1477
    %v1493 = vpack.c.b16 %v1480, %v1479
    %v1494 = vpack.c.b16 %v1482, %v1481
    %v1495 = vpack.c.b16 %v1484, %v1483
    %v1496 = vpack.c.b16 %v1486, %v1485
    %v1497 = vpack.c.b16 %v1488, %v1487
    %v1498 = vpack.c.b16 %v1490, %v1489
    %1507 = vmatpush.bf16.msra.mxu0 %v1498
    %1508 = vmatpush.bf16.msra.mxu0 %v1497
    %1509 = vmatpush.bf16.msra.mxu0 %v1496
    %1510 = vmatpush.bf16.msra.mxu0 %v1495
    %1511 = vmatpush.bf16.msra.mxu0 %v1494
    %1512 = vmatpush.bf16.msra.mxu0 %v1493
    %1513 = vmatpush.bf16.msra.mxu0 %v1492
    %1514 = vmatpush.bf16.msra.mxu0 %v1491
    %1515 = vmatmul.bf16.gmra.mxu0 %v1438
    %v1516 = vpop.f32.mrf.mxu0
    %v1517 = vadd.f32 %v1457, %v1516
    %v1518 = vpop.f32.mrf.mxu0
    %1519 = vdwg.mxu0
    %v1520 = vld [vmem:[#allocation7] sm:$0xff]
    %v1521 = vld [vmem:[#allocation7 + $0x8] sm:$0xff]
    %v1522 = vld [vmem:[#allocation7 + $0x10] sm:$0xff]
    %v1523 = vld [vmem:[#allocation7 + $0x18] sm:$0xff]
    %v1524 = vld [vmem:[#allocation7 + $0x20] sm:$0xff]
    %v1525 = vld [vmem:[#allocation7 + $0x28] sm:$0xff]
    %v1526 = vld [vmem:[#allocation7 + $0x30] sm:$0xff]
    %v1527 = vld [vmem:[#allocation7 + $0x38] sm:$0xff]
    %v1528 = vld [vmem:[#allocation7 + $0x40] sm:$0xff]
    %v1529 = vld [vmem:[#allocation7 + $0x48] sm:$0xff]
    %v1530 = vld [vmem:[#allocation7 + $0x50] sm:$0xff]
    %v1531 = vld [vmem:[#allocation7 + $0x58] sm:$0xff]
    %v1532 = vld [vmem:[#allocation7 + $0x60] sm:$0xff]
    %v1533 = vld [vmem:[#allocation7 + $0x68] sm:$0xff]
    %v1534 = vld [vmem:[#allocation7 + $0x70] sm:$0xff]
    %v1535 = vld [vmem:[#allocation7 + $0x78] sm:$0xff]
    %v1536 = vld [vmem:[%s7] sm:$0x1]
    %v1538 = vperm.slane %v1536, 0
    %1540 = vmatpush.msra.mxu0 %v1535
    %1541 = vmatpush.msra.mxu0 %v1534
    %1542 = vmatpush.msra.mxu0 %v1533
    %1543 = vmatpush.msra.mxu0 %v1532
    %1544 = vmatpush.msra.mxu0 %v1531
    %1545 = vmatpush.msra.mxu0 %v1530
    %1546 = vmatpush.msra.mxu0 %v1529
    %1547 = vmatpush.msra.mxu0 %v1528
    %1548 = vmatpush.msra.mxu0 %v1527
    %1549 = vmatpush.msra.mxu0 %v1526
    %1550 = vmatpush.msra.mxu0 %v1525
    %1551 = vmatpush.msra.mxu0 %v1524
    %1552 = vmatpush.msra.mxu0 %v1523
    %1553 = vmatpush.msra.mxu0 %v1522
    %1554 = vmatpush.msra.mxu0 %v1521
    %1555 = vmatpush.msra.mxu0 %v1520
    %1556 = vmatmul.f32.gmra.mxu0 %v1517
    %v1557 = vpop.f32.mrf.mxu0
    %v1558 = vadd.f32 %v1538, %v1557
    %1559 = vdwg.mxu0
    %1560 = vmax.xlane.f32.xlu0 %v1558
    %v1561 = vpop.xlane.xlu0 %1560
    %v1562 = vsub.f32 %v1558, %v1561
    %v1563 = vmul.f32 %v1562, 1.442695
    %v1564 = vpow.pop %v1563
    %1565 = vadd.xlane.f32.xlu0 %v1564
    %v1566 = vpop.xlane.xlu0 %1565
    %v1567 = vrcp.pop %v1566
    %v1568 = vmul.f32 %v1566, %v1567
    %v1569 = vsub.f32 1.0, %v1568
    %v1570 = vmul.f32 %v1567, %v1569
    %v1571 = vadd.f32 %v1567, %v1570
    %vm1572 = vweird.f32 %v1566
    %vm1573 = vweird.f32 %v1567
    %vm1574 = vmor %vm1572, %vm1573
    %v1575 = vsel %vm1574, %v1567, %v1571
    %v1576 = vand.u32 2147483647, %v1566
    %vm1577 = vcmp.eq.f32.partialorder %v1576, 8.507059e+37
    %v1578 = vand.u32 %v1566, 2147483648
    %v1579 = vor.u32 1.1754944e-38, %v1578
    %v1580 = vsel %vm1577, %v1579, %v1575
    %v1581 = vmul.f32 %v1564, %v1580
    %1582 = vst [vmem:[#allocation8] sm:$0xff] %v1581
    // Predicated region
    $region46: #{tpu_custom_call.1} parent=1 // pred_check
      _
    $region47: #{tpu_custom_call.1} parent=1 // pred_check_branch
      %1584 = sbr.rel (0) target = $region49
    $region48: #{tpu_custom_call.1} parent=1 // pred_region
      %1586 = vsyncadd [#allocation4], 0
      %s1588 = sshll.u32 [#allocation8], 4
      %s1589 = int_to_ptr.vmem [resolvable:$true] %s1588
      %s1590 = sshll.u32 %s8, 4
      %s1591 = int_to_ptr.hbm [resolvable:$true] %s1590
      %1593 = dma.vmem_to_hbm [thread:$0]  %s1589, 128, %s1591, [#allocation4]
    $region49: #{tpu_custom_call.1} parent=1 // pred_fallthru
      _
    // Predicated region
    $region50: #{tpu_custom_call.1} parent=1 // pred_check
      _
    $region51: #{tpu_custom_call.1} parent=1 // pred_check_branch
      %1595 = sbr.rel (0) target = $region53
    $region52: #{tpu_custom_call.1} parent=1 // pred_region
      %1597 = dma.done [#allocation4], 128
    $region53: #{tpu_custom_call.1} parent=1 // pred_fallthru
      _
    %1598 = vsyncpa [#allocation3], 1
    %1599 = vsyncpa [#allocation6], 1
    %1600 = vsyncpa [#allocation4], 1

</llo_original>
